<compile_context>
chip_gen: v5e
topology: v5e:2x2
jax: 0.10.0
libtpu: 0.0.40
codegen_flags: <defaults>
</compile_context>

<pallas_src>
import functools

import jax
import jax.numpy as jnp
from jax import lax
from jax.experimental import pallas as pl
from jax.experimental.pallas import tpu as pltpu


def _round_up(x, m):
    return ((x + m - 1) // m) * m


# ----------------------------- in-kernel helpers ------------------------------

def _bmm(a, b):
    """Batched (H, M, K) @ (H, K, N) -> (H, M, N), f32 accumulation on the MXU."""
    return lax.dot_general(a, b, (((2,), (1,)), ((0,), (0,))),
                           preferred_element_type=jnp.float32)


def _bmm_t(a, b):
    """Batched (H, M, K) @ (H, N, K)^T -> (H, M, N), f32 accumulation on the MXU."""
    return lax.dot_general(a, b, (((2,), (2,)), ((0,), (0,))),
                           preferred_element_type=jnp.float32)


def _ln_gelu(x, g, b):
    # FiberNorm for degree-0 features: LayerNorm over channels + GELU nonlinearity (f32).
    mu = jnp.mean(x, axis=-1, keepdims=True)
    var = jnp.maximum(jnp.mean(x * x, axis=-1, keepdims=True) - mu * mu, 0.0)
    xhat = (x - mu) * lax.rsqrt(var + 1e-5)
    return jax.nn.gelu(xhat * g + b)


def _vec_norm_gated(slab, g, b, c1):
    # FiberNorm for degree-1 features stored lane-dense as (N, 3*C1), m-major columns.
    # Returns the three gated m-components separately (no concat, no divide).
    xm = [slab[:, m * c1:(m + 1) * c1] for m in range(3)]
    sq = xm[0] * xm[0] + xm[1] * xm[1] + xm[2] * xm[2] + 1e-8    # (N, C1)
    inv_nrm = lax.rsqrt(sq)                                      # EUP slot
    nrm = sq * inv_nrm                                           # sqrt(sq) without a 2nd transcendental
    mu = jnp.mean(nrm, axis=-1, keepdims=True)
    var = jnp.maximum(jnp.mean(sq, axis=-1, keepdims=True) - mu * mu, 0.0)
    nhat = (nrm - mu) * lax.rsqrt(var + 1e-5)
    gate = jax.nn.gelu(nhat * g + b) * inv_nrm                   # (N, C1)
    return [x * gate for x in xm]


# ----------------------------- fused layer kernel ------------------------------

def _attention_layer_kernel(
        x_ref,
        n1g0_ref, n1b0_ref, n1g1_ref, n1b1_ref,
        wq_ref, wk_ref, wv0_ref, wv1_ref, wo0_ref, wo1_ref,
        n2g0_ref, n2b0_ref, n2g1_ref, n2b1_ref,
        ffw1_ref, ffb1_ref, ffw2_ref, ffb2_ref,
        ffw1v_ref, ffw2v_ref,
        out_ref,
        *, n_heads, c0, c1):
    f32, bf16 = jnp.float32, jnp.bfloat16
    n = x_ref.shape[0]
    x_in = x_ref[...]                       # (N, Cpad) f32: [deg0 | deg1 m-major | zero pad]

    # ---------------- AttentionBlock: prenorm -> attention -> (dropout=id) -> residual
    n0 = _ln_gelu(x_in[:, :c0], n1g0_ref[...], n1b0_ref[...])                         # (N, C0)
    n1m = _vec_norm_gated(x_in[:, c0:c0 + 3 * c1], n1g1_ref[...], n1b1_ref[...], c1)  # 3x (N, C1)

    n0b = jnp.broadcast_to(n0.astype(bf16)[None], (n_heads, n, c0))                   # (H, N, C0)

    q = _bmm(n0b, wq_ref[...])              # (H, N, dh); 1/sqrt(dh) folded into Wq
    k = _bmm(n0b, wk_ref[...])              # (H, N, dh)
    v0 = _bmm(n0b, wv0_ref[...])            # (H, N, dh)

    s = _bmm_t(q.astype(bf16), k.astype(bf16))                                        # (H, N, N)
    s = s - jnp.max(s, axis=-1, keepdims=True)
    p = jnp.exp(s)
    p = p * pl.reciprocal(jnp.sum(p, axis=-1, keepdims=True), approx=True)
    pb = p.astype(bf16)

    o0 = _bmm(pb, v0.astype(bf16))                                                    # (H, N, dh)
    a = jnp.sum(_bmm(o0.astype(bf16), wo0_ref[...]), axis=0)                          # (N, Cpad)

    wv1 = wv1_ref[...]                      # (H, C1, cph) shared across m (equivariance)
    for m in range(3):                      # degree-1 values, one m-component at a time
        n1mb = jnp.broadcast_to(n1m[m].astype(bf16)[None], (n_heads, n, c1))
        v1 = _bmm(n1mb, wv1)                                                          # (H, N, cph)
        o1 = _bmm(pb, v1.astype(bf16))                                                # (H, N, cph)
        a = a + jnp.sum(_bmm(o1.astype(bf16), wo1_ref[m]), axis=0)                    # (N, Cpad)

    x_mid = x_in + a                        # residual 1 (dropout = identity, no re-zero)

    # ---------------- FiberFeedForwardResidualBlock: prenorm -> FF -> residual
    m0 = _ln_gelu(x_mid[:, :c0], n2g0_ref[...], n2b0_ref[...])
    m1m = _vec_norm_gated(x_mid[:, c0:c0 + 3 * c1], n2g1_ref[...], n2b1_ref[...], c1)

    h0 = jax.nn.gelu(jnp.dot(m0.astype(bf16), ffw1_ref[...],
                             preferred_element_type=f32) + ffb1_ref[...])             # (N, Hpad)
    ff = jnp.dot(h0.astype(bf16), ffw2_ref[...],
                 preferred_element_type=f32) + ffb2_ref[...]                          # (N, Cpad)

    w1v = ffw1v_ref[...]                    # (C1, C1*mult); degree-1 FF: no bias / no nonlin (l>0)
    for m in range(3):
        h1 = jnp.dot(m1m[m].astype(bf16), w1v, preferred_element_type=f32)            # (N, C1*mult)
        ff = ff + jnp.dot(h1.astype(bf16), ffw2v_ref[m], preferred_element_type=f32)  # -> cols of Cpad

    out_ref[...] = x_mid + ff               # single lane-dense full-width store


# ----------------------------- parameters -----------------------------------

def init_params(key, c0, c1, hidden_mult):
    keys = jax.random.split(key, 16)

    def w(k, fan_in, fan_out):
        return (jax.random.normal(k, (fan_in, fan_out), jnp.float32)
                / jnp.sqrt(jnp.float32(fan_in)))

    return dict(
        # FiberNorm (attention pre-norm)
        norm1_g0=jnp.ones((c0,), jnp.float32), norm1_b0=jnp.zeros((c0,), jnp.float32),
        norm1_g1=jnp.ones((c1,), jnp.float32), norm1_b1=jnp.zeros((c1,), jnp.float32),
        # TFNAttention projections
        Wq=w(keys[0], c0, c0), Wk=w(keys[1], c0, c0),
        Wv0=w(keys[2], c0, c0), Wv1=w(keys[3], c1, c1),
        Wo0=w(keys[4], c0, c0), Wo1=w(keys[5], c1, c1),
        # FiberNorm (feed-forward pre-norm)
        norm2_g0=jnp.ones((c0,), jnp.float32), norm2_b0=jnp.zeros((c0,), jnp.float32),
        norm2_g1=jnp.ones((c1,), jnp.float32), norm2_b1=jnp.zeros((c1,), jnp.float32),
        # FiberFeedForward (hidden_mult, n_hidden=1)
        ff_w1=w(keys[6], c0, c0 * hidden_mult),
        ff_b1=jnp.zeros((c0 * hidden_mult,), jnp.float32),
        ff_w2=w(keys[7], c0 * hidden_mult, c0),
        ff_b2=jnp.zeros((c0,), jnp.float32),
        ff_w1v=w(keys[8], c1, c1 * hidden_mult),
        ff_w2v=w(keys[9], c1 * hidden_mult, c1),
    )


# ----------------------------- forward pass ----------------------------------

def attention_layer_forward(params, feats0, feats1, n_heads):
    """AttentionLayer.forward: attn_block(features) -> ff_residual(...).

    feats0: (N, C0)    degree-0 features
    feats1: (N, 3, C1) degree-1 features (spatial m in middle dim)
    """
    n, c0 = feats0.shape
    _, _, c1 = feats1.shape
    dh = c0 // n_heads
    cph = c1 // n_heads
    hidden = params["ff_w1"].shape[1]
    hidden_v = params["ff_w1v"].shape[1]
    c_pad = _round_up(c0 + 3 * c1, 128)
    hid_pad = _round_up(hidden, 128)

    f32, bf16 = jnp.float32, jnp.bfloat16

    # Single lane-dense padded feature slab: [deg0 (C0) | deg1 m-major (3*C1) | zeros].
    x = jnp.zeros((n, c_pad), f32)
    x = x.at[:, :c0].set(feats0.astype(f32))
    x = x.at[:, c0:c0 + 3 * c1].set(feats1.reshape(n, 3 * c1).astype(f32))

    # ----- head-major weight packing (constant-folded under jit), bf16 for the MXU -----
    scale = 1.0 / (dh ** 0.5)

    def heads_cols(wmat, d):                 # (Cin, H*d) -> (H, Cin, d)
        cin = wmat.shape[0]
        return wmat.reshape(cin, n_heads, d).transpose(1, 0, 2)

    wq3 = (heads_cols(params["Wq"], dh) * scale).astype(bf16)      # scale folded into Q
    wk3 = heads_cols(params["Wk"], dh).astype(bf16)
    wv03 = heads_cols(params["Wv0"], dh).astype(bf16)
    wv13 = heads_cols(params["Wv1"], cph).astype(bf16)

    # Output projections zero-padded to the fused Cpad lane layout.
    wo03 = jnp.zeros((n_heads, dh, c_pad), f32)
    wo03 = wo03.at[:, :, :c0].set(params["Wo0"].reshape(n_heads, dh, c0)).astype(bf16)

    wo1_h = params["Wo1"].reshape(n_heads, cph, c1)
    wo13 = jnp.zeros((3, n_heads, cph, c_pad), f32)
    for m in range(3):
        wo13 = wo13.at[m, :, :, c0 + m * c1: c0 + (m + 1) * c1].set(wo1_h)
    wo13 = wo13.astype(bf16)

    ffw1 = jnp.zeros((c0, hid_pad), f32).at[:, :hidden].set(params["ff_w1"]).astype(bf16)
    ffb1 = jnp.zeros((1, hid_pad), f32).at[:, :hidden].set(params["ff_b1"])
    ffw2 = jnp.zeros((hid_pad, c_pad), f32).at[:hidden, :c0].set(params["ff_w2"]).astype(bf16)
    ffb2 = jnp.zeros((1, c_pad), f32).at[:, :c0].set(params["ff_b2"])

    ffw1v = params["ff_w1v"].astype(bf16)                          # (C1, C1*mult)
    ffw2v = jnp.zeros((3, hidden_v, c_pad), f32)
    for m in range(3):
        ffw2v = ffw2v.at[m, :, c0 + m * c1: c0 + (m + 1) * c1].set(params["ff_w2v"])
    ffw2v = ffw2v.astype(bf16)

    kernel = functools.partial(_attention_layer_kernel,
                               n_heads=n_heads, c0=c0, c1=c1)

    out = pl.pallas_call(
        kernel,
        out_shape=jax.ShapeDtypeStruct((n, c_pad), f32),
        compiler_params=pltpu.CompilerParams(vmem_limit_bytes=32 * 1024 * 1024),
    )(x,
      params["norm1_g0"].reshape(1, c0), params["norm1_b0"].reshape(1, c0),
      params["norm1_g1"].reshape(1, c1), params["norm1_b1"].reshape(1, c1),
      wq3, wk3, wv03, wv13, wo03, wo13,
      params["norm2_g0"].reshape(1, c0), params["norm2_b0"].reshape(1, c0),
      params["norm2_g1"].reshape(1, c1), params["norm2_b1"].reshape(1, c1),
      ffw1, ffb1, ffw2, ffb2, ffw1v, ffw2v)

    return out[:, :c0], out[:, c0:c0 + 3 * c1].reshape(n, 3, c1)


# ----------------------------------- main -------------------------------------

if __name__ == "__main__":
    N_NODES = 16     # number of points / nodes
    C0 = 32          # degree-0 channel multiplicity
    C1 = 16          # degree-1 channel multiplicity
    HEADS = 4
    HIDDEN_MULT = 2

    key = jax.random.PRNGKey(0)
    k_f0, k_f1, k_p = jax.random.split(key, 3)

    # features dict {'0': (N, C0, 1), '1': (N, C1, 3)} in PyTorch convention ->
    # kernel layout (N, C0) and (N, 3, C1)
    feats0 = jax.random.normal(k_f0, (N_NODES, C0), jnp.float32)
    feats1 = jax.random.normal(k_f1, (N_NODES, 3, C1), jnp.float32)

    params = init_params(k_p, C0, C1, HIDDEN_MULT)

    fwd = jax.jit(functools.partial(attention_layer_forward, n_heads=HEADS))
    out0, out1 = fwd(params, feats0, feats1)
    jax.block_until_ready((out0, out1))

    assert out0.shape == (N_NODES, C0)
    assert out1.shape == (N_NODES, 3, C1)
    assert bool(jnp.all(jnp.isfinite(out0))) and bool(jnp.all(jnp.isfinite(out1)))
    print("KERNEL_OK")
</pallas_src>

<mosaic_0001>
module attributes {stable_mosaic.version = 11 : i64} {
  func.func @_attention_layer_kernel(%arg0: memref<16x128xf32, #tpu.memory_space<vmem>>, %arg1: memref<1x32xf32, #tpu.memory_space<vmem>>, %arg2: memref<1x32xf32, #tpu.memory_space<vmem>>, %arg3: memref<1x16xf32, #tpu.memory_space<vmem>>, %arg4: memref<1x16xf32, #tpu.memory_space<vmem>>, %arg5: memref<4x32x8xbf16, #tpu.memory_space<vmem>>, %arg6: memref<4x32x8xbf16, #tpu.memory_space<vmem>>, %arg7: memref<4x32x8xbf16, #tpu.memory_space<vmem>>, %arg8: memref<4x16x4xbf16, #tpu.memory_space<vmem>>, %arg9: memref<4x8x128xbf16, #tpu.memory_space<vmem>>, %arg10: memref<3x4x4x128xbf16, #tpu.memory_space<vmem>>, %arg11: memref<1x32xf32, #tpu.memory_space<vmem>>, %arg12: memref<1x32xf32, #tpu.memory_space<vmem>>, %arg13: memref<1x16xf32, #tpu.memory_space<vmem>>, %arg14: memref<1x16xf32, #tpu.memory_space<vmem>>, %arg15: memref<32x128xbf16, #tpu.memory_space<vmem>>, %arg16: memref<1x128xf32, #tpu.memory_space<vmem>>, %arg17: memref<128x128xbf16, #tpu.memory_space<vmem>>, %arg18: memref<1x128xf32, #tpu.memory_space<vmem>>, %arg19: memref<16x32xbf16, #tpu.memory_space<vmem>>, %arg20: memref<3x32x128xbf16, #tpu.memory_space<vmem>>, %arg21: memref<16x128xf32, #tpu.memory_space<vmem>>) attributes {dimension_semantics = [], scalar_prefetch = 0 : i64, scratch_operands = 0 : i64, tpu.core_type = #tpu.core_type<tc>} {
    %c0 = arith.constant 0 : index
    %c0_0 = arith.constant 0 : index
    %0 = vector.load %arg0[%c0, %c0_0] : memref<16x128xf32, #tpu.memory_space<vmem>>, vector<16x128xf32>
    %1 = vector.extract_strided_slice %0 {offsets = [0, 0], sizes = [16, 32], strides = [1, 1]} : vector<16x128xf32> to vector<16x32xf32>
    %c0_1 = arith.constant 0 : index
    %c0_2 = arith.constant 0 : index
    %2 = vector.load %arg1[%c0_1, %c0_2] : memref<1x32xf32, #tpu.memory_space<vmem>>, vector<1x32xf32>
    %c0_3 = arith.constant 0 : index
    %c0_4 = arith.constant 0 : index
    %3 = vector.load %arg2[%c0_3, %c0_4] : memref<1x32xf32, #tpu.memory_space<vmem>>, vector<1x32xf32>
    %cst = arith.constant dense<0.000000e+00> : vector<16xf32>
    %4 = vector.multi_reduction <add>, %1, %cst [1] : vector<16x32xf32> to vector<16xf32>
    %5 = vector.shape_cast %4 : vector<16xf32> to vector<16x1xf32>
    %cst_5 = arith.constant 3.200000e+01 : f32
    %6 = vector.broadcast %cst_5 : f32 to vector<16x1xf32>
    %7 = arith.divf %5, %6 : vector<16x1xf32>
    %8 = arith.mulf %1, %1 : vector<16x32xf32>
    %cst_6 = arith.constant dense<0.000000e+00> : vector<16xf32>
    %9 = vector.multi_reduction <add>, %8, %cst_6 [1] : vector<16x32xf32> to vector<16xf32>
    %10 = vector.shape_cast %9 : vector<16xf32> to vector<16x1xf32>
    %cst_7 = arith.constant 3.200000e+01 : f32
    %11 = vector.broadcast %cst_7 : f32 to vector<16x1xf32>
    %12 = arith.divf %10, %11 : vector<16x1xf32>
    %13 = arith.mulf %7, %7 : vector<16x1xf32>
    %14 = arith.subf %12, %13 : vector<16x1xf32>
    %cst_8 = arith.constant 0.000000e+00 : f32
    %15 = vector.broadcast %cst_8 : f32 to vector<16x1xf32>
    %16 = arith.maximumf %14, %15 : vector<16x1xf32>
    %17 = vector.broadcast %7 : vector<16x1xf32> to vector<16x32xf32>
    %18 = arith.subf %1, %17 : vector<16x32xf32>
    %cst_9 = arith.constant 9.99999974E-6 : f32
    %19 = vector.broadcast %cst_9 : f32 to vector<16x1xf32>
    %20 = arith.addf %16, %19 : vector<16x1xf32>
    %21 = math.rsqrt %20 : vector<16x1xf32>
    %22 = vector.broadcast %21 : vector<16x1xf32> to vector<16x32xf32>
    %23 = arith.mulf %18, %22 : vector<16x32xf32>
    %24 = vector.broadcast %2 : vector<1x32xf32> to vector<16x32xf32>
    %25 = arith.mulf %23, %24 : vector<16x32xf32>
    %26 = vector.broadcast %3 : vector<1x32xf32> to vector<16x32xf32>
    %27 = arith.addf %25, %26 : vector<16x32xf32>
    %28 = arith.mulf %27, %27 : vector<16x32xf32>
    %29 = arith.mulf %27, %28 : vector<16x32xf32>
    %cst_10 = arith.constant 4.471500e-02 : f32
    %30 = vector.broadcast %cst_10 : f32 to vector<16x32xf32>
    %31 = arith.mulf %30, %29 : vector<16x32xf32>
    %32 = arith.addf %27, %31 : vector<16x32xf32>
    %cst_11 = arith.constant 0.797884583 : f32
    %33 = vector.broadcast %cst_11 : f32 to vector<16x32xf32>
    %34 = arith.mulf %33, %32 : vector<16x32xf32>
    %35 = math.tanh %34 : vector<16x32xf32>
    %cst_12 = arith.constant 1.000000e+00 : f32
    %36 = vector.broadcast %cst_12 : f32 to vector<16x32xf32>
    %37 = arith.addf %36, %35 : vector<16x32xf32>
    %cst_13 = arith.constant 5.000000e-01 : f32
    %38 = vector.broadcast %cst_13 : f32 to vector<16x32xf32>
    %39 = arith.mulf %38, %37 : vector<16x32xf32>
    %40 = arith.mulf %27, %39 : vector<16x32xf32>
    %41 = vector.extract_strided_slice %0 {offsets = [0, 32], sizes = [16, 48], strides = [1, 1]} : vector<16x128xf32> to vector<16x48xf32>
    %c0_14 = arith.constant 0 : index
    %c0_15 = arith.constant 0 : index
    %42 = vector.load %arg3[%c0_14, %c0_15] : memref<1x16xf32, #tpu.memory_space<vmem>>, vector<1x16xf32>
    %c0_16 = arith.constant 0 : index
    %c0_17 = arith.constant 0 : index
    %43 = vector.load %arg4[%c0_16, %c0_17] : memref<1x16xf32, #tpu.memory_space<vmem>>, vector<1x16xf32>
    %44 = vector.extract_strided_slice %41 {offsets = [0, 0], sizes = [16, 16], strides = [1, 1]} : vector<16x48xf32> to vector<16x16xf32>
    %45 = vector.extract_strided_slice %41 {offsets = [0, 16], sizes = [16, 16], strides = [1, 1]} : vector<16x48xf32> to vector<16x16xf32>
    %46 = vector.extract_strided_slice %41 {offsets = [0, 32], sizes = [16, 16], strides = [1, 1]} : vector<16x48xf32> to vector<16x16xf32>
    %47 = arith.mulf %44, %44 : vector<16x16xf32>
    %48 = arith.mulf %45, %45 : vector<16x16xf32>
    %49 = arith.addf %47, %48 : vector<16x16xf32>
    %50 = arith.mulf %46, %46 : vector<16x16xf32>
    %51 = arith.addf %49, %50 : vector<16x16xf32>
    %cst_18 = arith.constant 9.99999993E-9 : f32
    %52 = vector.broadcast %cst_18 : f32 to vector<16x16xf32>
    %53 = arith.addf %51, %52 : vector<16x16xf32>
    %54 = math.rsqrt %53 : vector<16x16xf32>
    %55 = arith.mulf %53, %54 : vector<16x16xf32>
    %cst_19 = arith.constant dense<0.000000e+00> : vector<16xf32>
    %56 = vector.multi_reduction <add>, %55, %cst_19 [1] : vector<16x16xf32> to vector<16xf32>
    %57 = vector.shape_cast %56 : vector<16xf32> to vector<16x1xf32>
    %cst_20 = arith.constant 1.600000e+01 : f32
    %58 = vector.broadcast %cst_20 : f32 to vector<16x1xf32>
    %59 = arith.divf %57, %58 : vector<16x1xf32>
    %cst_21 = arith.constant dense<0.000000e+00> : vector<16xf32>
    %60 = vector.multi_reduction <add>, %53, %cst_21 [1] : vector<16x16xf32> to vector<16xf32>
    %61 = vector.shape_cast %60 : vector<16xf32> to vector<16x1xf32>
    %cst_22 = arith.constant 1.600000e+01 : f32
    %62 = vector.broadcast %cst_22 : f32 to vector<16x1xf32>
    %63 = arith.divf %61, %62 : vector<16x1xf32>
    %64 = arith.mulf %59, %59 : vector<16x1xf32>
    %65 = arith.subf %63, %64 : vector<16x1xf32>
    %cst_23 = arith.constant 0.000000e+00 : f32
    %66 = vector.broadcast %cst_23 : f32 to vector<16x1xf32>
    %67 = arith.maximumf %65, %66 : vector<16x1xf32>
    %68 = vector.broadcast %59 : vector<16x1xf32> to vector<16x16xf32>
    %69 = arith.subf %55, %68 : vector<16x16xf32>
    %cst_24 = arith.constant 9.99999974E-6 : f32
    %70 = vector.broadcast %cst_24 : f32 to vector<16x1xf32>
    %71 = arith.addf %67, %70 : vector<16x1xf32>
    %72 = math.rsqrt %71 : vector<16x1xf32>
    %73 = vector.broadcast %72 : vector<16x1xf32> to vector<16x16xf32>
    %74 = arith.mulf %69, %73 : vector<16x16xf32>
    %75 = vector.broadcast %42 : vector<1x16xf32> to vector<16x16xf32>
    %76 = arith.mulf %74, %75 : vector<16x16xf32>
    %77 = vector.broadcast %43 : vector<1x16xf32> to vector<16x16xf32>
    %78 = arith.addf %76, %77 : vector<16x16xf32>
    %79 = arith.mulf %78, %78 : vector<16x16xf32>
    %80 = arith.mulf %78, %79 : vector<16x16xf32>
    %cst_25 = arith.constant 4.471500e-02 : f32
    %81 = vector.broadcast %cst_25 : f32 to vector<16x16xf32>
    %82 = arith.mulf %81, %80 : vector<16x16xf32>
    %83 = arith.addf %78, %82 : vector<16x16xf32>
    %cst_26 = arith.constant 0.797884583 : f32
    %84 = vector.broadcast %cst_26 : f32 to vector<16x16xf32>
    %85 = arith.mulf %84, %83 : vector<16x16xf32>
    %86 = math.tanh %85 : vector<16x16xf32>
    %cst_27 = arith.constant 1.000000e+00 : f32
    %87 = vector.broadcast %cst_27 : f32 to vector<16x16xf32>
    %88 = arith.addf %87, %86 : vector<16x16xf32>
    %cst_28 = arith.constant 5.000000e-01 : f32
    %89 = vector.broadcast %cst_28 : f32 to vector<16x16xf32>
    %90 = arith.mulf %89, %88 : vector<16x16xf32>
    %91 = arith.mulf %78, %90 : vector<16x16xf32>
    %92 = arith.mulf %91, %54 : vector<16x16xf32>
    %93 = arith.mulf %44, %92 : vector<16x16xf32>
    %94 = arith.mulf %45, %92 : vector<16x16xf32>
    %95 = arith.mulf %46, %92 : vector<16x16xf32>
    %96 = arith.truncf %40 : vector<16x32xf32> to vector<16x32xbf16>
    %97 = vector.shape_cast %96 : vector<16x32xbf16> to vector<1x16x32xbf16>
    %98 = vector.shape_cast %97 : vector<1x16x32xbf16> to vector<1x16x32xbf16>
    %99 = vector.broadcast %98 : vector<1x16x32xbf16> to vector<4x16x32xbf16>
    %c0_29 = arith.constant 0 : index
    %c0_30 = arith.constant 0 : index
    %c0_31 = arith.constant 0 : index
    %100 = vector.load %arg5[%c0_29, %c0_30, %c0_31] : memref<4x32x8xbf16, #tpu.memory_space<vmem>>, vector<4x32x8xbf16>
    %cst_32 = arith.constant dense<0.000000e+00> : vector<4x16x8xf32>
    %101 = tpu.matmul %99, %100, %cst_32 {dimension_numbers = #tpu.dot_dimension_numbers<[2], [1], [1], [2], [0, 0, 0, 1, 1, 2], [0], [0]>} : vector<4x16x32xbf16>, vector<4x32x8xbf16>, vector<4x16x8xf32> -> vector<4x16x8xf32>
    %c0_33 = arith.constant 0 : index
    %c0_34 = arith.constant 0 : index
    %c0_35 = arith.constant 0 : index
    %102 = vector.load %arg6[%c0_33, %c0_34, %c0_35] : memref<4x32x8xbf16, #tpu.memory_space<vmem>>, vector<4x32x8xbf16>
    %cst_36 = arith.constant dense<0.000000e+00> : vector<4x16x8xf32>
    %103 = tpu.matmul %99, %102, %cst_36 {dimension_numbers = #tpu.dot_dimension_numbers<[2], [1], [1], [2], [0, 0, 0, 1, 1, 2], [0], [0]>} : vector<4x16x32xbf16>, vector<4x32x8xbf16>, vector<4x16x8xf32> -> vector<4x16x8xf32>
    %c0_37 = arith.constant 0 : index
    %c0_38 = arith.constant 0 : index
    %c0_39 = arith.constant 0 : index
    %104 = vector.load %arg7[%c0_37, %c0_38, %c0_39] : memref<4x32x8xbf16, #tpu.memory_space<vmem>>, vector<4x32x8xbf16>
    %cst_40 = arith.constant dense<0.000000e+00> : vector<4x16x8xf32>
    %105 = tpu.matmul %99, %104, %cst_40 {dimension_numbers = #tpu.dot_dimension_numbers<[2], [1], [1], [2], [0, 0, 0, 1, 1, 2], [0], [0]>} : vector<4x16x32xbf16>, vector<4x32x8xbf16>, vector<4x16x8xf32> -> vector<4x16x8xf32>
    %106 = arith.truncf %101 : vector<4x16x8xf32> to vector<4x16x8xbf16>
    %107 = arith.truncf %103 : vector<4x16x8xf32> to vector<4x16x8xbf16>
    %cst_41 = arith.constant dense<0.000000e+00> : vector<4x16x16xf32>
    %108 = tpu.matmul %106, %107, %cst_41 {dimension_numbers = #tpu.dot_dimension_numbers<[2], [2], [1], [1], [0, 0, 0, 1, 1, 1], [0], [0]>} : vector<4x16x8xbf16>, vector<4x16x8xbf16>, vector<4x16x16xf32> -> vector<4x16x16xf32>
    %cst_42 = arith.constant dense<0xFF800000> : vector<4x16xf32>
    %109 = vector.multi_reduction <maximumf>, %108, %cst_42 [2] : vector<4x16x16xf32> to vector<4x16xf32>
    %110 = vector.shape_cast %109 : vector<4x16xf32> to vector<4x16x1xf32>
    %111 = vector.broadcast %110 : vector<4x16x1xf32> to vector<4x16x16xf32>
    %112 = arith.subf %108, %111 : vector<4x16x16xf32>
    %113 = math.exp %112 : vector<4x16x16xf32>
    %cst_43 = arith.constant dense<0.000000e+00> : vector<4x16xf32>
    %114 = vector.multi_reduction <add>, %113, %cst_43 [2] : vector<4x16x16xf32> to vector<4x16xf32>
    %115 = vector.shape_cast %114 : vector<4x16xf32> to vector<4x16x1xf32>
    %116 = tpu.reciprocal %115 {approx = true} : vector<4x16x1xf32> -> vector<4x16x1xf32>
    %117 = vector.broadcast %116 : vector<4x16x1xf32> to vector<4x16x16xf32>
    %118 = arith.mulf %113, %117 : vector<4x16x16xf32>
    %119 = arith.truncf %118 : vector<4x16x16xf32> to vector<4x16x16xbf16>
    %120 = arith.truncf %105 : vector<4x16x8xf32> to vector<4x16x8xbf16>
    %cst_44 = arith.constant dense<0.000000e+00> : vector<4x16x8xf32>
    %121 = tpu.matmul %119, %120, %cst_44 {dimension_numbers = #tpu.dot_dimension_numbers<[2], [1], [1], [2], [0, 0, 0, 1, 1, 2], [0], [0]>} : vector<4x16x16xbf16>, vector<4x16x8xbf16>, vector<4x16x8xf32> -> vector<4x16x8xf32>
    %122 = arith.truncf %121 : vector<4x16x8xf32> to vector<4x16x8xbf16>
    %c0_45 = arith.constant 0 : index
    %c0_46 = arith.constant 0 : index
    %c0_47 = arith.constant 0 : index
    %123 = vector.load %arg9[%c0_45, %c0_46, %c0_47] : memref<4x8x128xbf16, #tpu.memory_space<vmem>>, vector<4x8x128xbf16>
    %cst_48 = arith.constant dense<0.000000e+00> : vector<4x16x128xf32>
    %124 = tpu.matmul %122, %123, %cst_48 {dimension_numbers = #tpu.dot_dimension_numbers<[2], [1], [1], [2], [0, 0, 0, 1, 1, 2], [0], [0]>} : vector<4x16x8xbf16>, vector<4x8x128xbf16>, vector<4x16x128xf32> -> vector<4x16x128xf32>
    %cst_49 = arith.constant dense<0.000000e+00> : vector<16x128xf32>
    %125 = vector.multi_reduction <add>, %124, %cst_49 [0] : vector<4x16x128xf32> to vector<16x128xf32>
    %c0_50 = arith.constant 0 : index
    %c0_51 = arith.constant 0 : index
    %c0_52 = arith.constant 0 : index
    %126 = vector.load %arg8[%c0_50, %c0_51, %c0_52] : memref<4x16x4xbf16, #tpu.memory_space<vmem>>, vector<4x16x4xbf16>
    %127 = arith.truncf %93 : vector<16x16xf32> to vector<16x16xbf16>
    %128 = vector.shape_cast %127 : vector<16x16xbf16> to vector<1x16x16xbf16>
    %129 = vector.shape_cast %128 : vector<1x16x16xbf16> to vector<1x16x16xbf16>
    %130 = vector.broadcast %129 : vector<1x16x16xbf16> to vector<4x16x16xbf16>
    %cst_53 = arith.constant dense<0.000000e+00> : vector<4x16x4xf32>
    %131 = tpu.matmul %130, %126, %cst_53 {dimension_numbers = #tpu.dot_dimension_numbers<[2], [1], [1], [2], [0, 0, 0, 1, 1, 2], [0], [0]>} : vector<4x16x16xbf16>, vector<4x16x4xbf16>, vector<4x16x4xf32> -> vector<4x16x4xf32>
    %132 = arith.truncf %131 : vector<4x16x4xf32> to vector<4x16x4xbf16>
    %cst_54 = arith.constant dense<0.000000e+00> : vector<4x16x4xf32>
    %133 = tpu.matmul %119, %132, %cst_54 {dimension_numbers = #tpu.dot_dimension_numbers<[2], [1], [1], [2], [0, 0, 0, 1, 1, 2], [0], [0]>} : vector<4x16x16xbf16>, vector<4x16x4xbf16>, vector<4x16x4xf32> -> vector<4x16x4xf32>
    %134 = arith.truncf %133 : vector<4x16x4xf32> to vector<4x16x4xbf16>
    %c0_55 = arith.constant 0 : index
    %c0_56 = arith.constant 0 : index
    %c0_57 = arith.constant 0 : index
    %c0_58 = arith.constant 0 : index
    %135 = vector.load %arg10[%c0_55, %c0_56, %c0_57, %c0_58] : memref<3x4x4x128xbf16, #tpu.memory_space<vmem>>, vector<1x4x4x128xbf16>
    %136 = vector.shape_cast %135 : vector<1x4x4x128xbf16> to vector<4x4x128xbf16>
    %cst_59 = arith.constant dense<0.000000e+00> : vector<4x16x128xf32>
    %137 = tpu.matmul %134, %136, %cst_59 {dimension_numbers = #tpu.dot_dimension_numbers<[2], [1], [1], [2], [0, 0, 0, 1, 1, 2], [0], [0]>} : vector<4x16x4xbf16>, vector<4x4x128xbf16>, vector<4x16x128xf32> -> vector<4x16x128xf32>
    %cst_60 = arith.constant dense<0.000000e+00> : vector<16x128xf32>
    %138 = vector.multi_reduction <add>, %137, %cst_60 [0] : vector<4x16x128xf32> to vector<16x128xf32>
    %139 = arith.addf %125, %138 : vector<16x128xf32>
    %140 = arith.truncf %94 : vector<16x16xf32> to vector<16x16xbf16>
    %141 = vector.shape_cast %140 : vector<16x16xbf16> to vector<1x16x16xbf16>
    %142 = vector.shape_cast %141 : vector<1x16x16xbf16> to vector<1x16x16xbf16>
    %143 = vector.broadcast %142 : vector<1x16x16xbf16> to vector<4x16x16xbf16>
    %cst_61 = arith.constant dense<0.000000e+00> : vector<4x16x4xf32>
    %144 = tpu.matmul %143, %126, %cst_61 {dimension_numbers = #tpu.dot_dimension_numbers<[2], [1], [1], [2], [0, 0, 0, 1, 1, 2], [0], [0]>} : vector<4x16x16xbf16>, vector<4x16x4xbf16>, vector<4x16x4xf32> -> vector<4x16x4xf32>
    %145 = arith.truncf %144 : vector<4x16x4xf32> to vector<4x16x4xbf16>
    %cst_62 = arith.constant dense<0.000000e+00> : vector<4x16x4xf32>
    %146 = tpu.matmul %119, %145, %cst_62 {dimension_numbers = #tpu.dot_dimension_numbers<[2], [1], [1], [2], [0, 0, 0, 1, 1, 2], [0], [0]>} : vector<4x16x16xbf16>, vector<4x16x4xbf16>, vector<4x16x4xf32> -> vector<4x16x4xf32>
    %147 = arith.truncf %146 : vector<4x16x4xf32> to vector<4x16x4xbf16>
    %c1 = arith.constant 1 : index
    %c0_63 = arith.constant 0 : index
    %c0_64 = arith.constant 0 : index
    %c0_65 = arith.constant 0 : index
    %148 = vector.load %arg10[%c1, %c0_63, %c0_64, %c0_65] : memref<3x4x4x128xbf16, #tpu.memory_space<vmem>>, vector<1x4x4x128xbf16>
    %149 = vector.shape_cast %148 : vector<1x4x4x128xbf16> to vector<4x4x128xbf16>
    %cst_66 = arith.constant dense<0.000000e+00> : vector<4x16x128xf32>
    %150 = tpu.matmul %147, %149, %cst_66 {dimension_numbers = #tpu.dot_dimension_numbers<[2], [1], [1], [2], [0, 0, 0, 1, 1, 2], [0], [0]>} : vector<4x16x4xbf16>, vector<4x4x128xbf16>, vector<4x16x128xf32> -> vector<4x16x128xf32>
    %cst_67 = arith.constant dense<0.000000e+00> : vector<16x128xf32>
    %151 = vector.multi_reduction <add>, %150, %cst_67 [0] : vector<4x16x128xf32> to vector<16x128xf32>
    %152 = arith.addf %139, %151 : vector<16x128xf32>
    %153 = arith.truncf %95 : vector<16x16xf32> to vector<16x16xbf16>
    %154 = vector.shape_cast %153 : vector<16x16xbf16> to vector<1x16x16xbf16>
    %155 = vector.shape_cast %154 : vector<1x16x16xbf16> to vector<1x16x16xbf16>
    %156 = vector.broadcast %155 : vector<1x16x16xbf16> to vector<4x16x16xbf16>
    %cst_68 = arith.constant dense<0.000000e+00> : vector<4x16x4xf32>
    %157 = tpu.matmul %156, %126, %cst_68 {dimension_numbers = #tpu.dot_dimension_numbers<[2], [1], [1], [2], [0, 0, 0, 1, 1, 2], [0], [0]>} : vector<4x16x16xbf16>, vector<4x16x4xbf16>, vector<4x16x4xf32> -> vector<4x16x4xf32>
    %158 = arith.truncf %157 : vector<4x16x4xf32> to vector<4x16x4xbf16>
    %cst_69 = arith.constant dense<0.000000e+00> : vector<4x16x4xf32>
    %159 = tpu.matmul %119, %158, %cst_69 {dimension_numbers = #tpu.dot_dimension_numbers<[2], [1], [1], [2], [0, 0, 0, 1, 1, 2], [0], [0]>} : vector<4x16x16xbf16>, vector<4x16x4xbf16>, vector<4x16x4xf32> -> vector<4x16x4xf32>
    %160 = arith.truncf %159 : vector<4x16x4xf32> to vector<4x16x4xbf16>
    %c2 = arith.constant 2 : index
    %c0_70 = arith.constant 0 : index
    %c0_71 = arith.constant 0 : index
    %c0_72 = arith.constant 0 : index
    %161 = vector.load %arg10[%c2, %c0_70, %c0_71, %c0_72] : memref<3x4x4x128xbf16, #tpu.memory_space<vmem>>, vector<1x4x4x128xbf16>
    %162 = vector.shape_cast %161 : vector<1x4x4x128xbf16> to vector<4x4x128xbf16>
    %cst_73 = arith.constant dense<0.000000e+00> : vector<4x16x128xf32>
    %163 = tpu.matmul %160, %162, %cst_73 {dimension_numbers = #tpu.dot_dimension_numbers<[2], [1], [1], [2], [0, 0, 0, 1, 1, 2], [0], [0]>} : vector<4x16x4xbf16>, vector<4x4x128xbf16>, vector<4x16x128xf32> -> vector<4x16x128xf32>
    %cst_74 = arith.constant dense<0.000000e+00> : vector<16x128xf32>
    %164 = vector.multi_reduction <add>, %163, %cst_74 [0] : vector<4x16x128xf32> to vector<16x128xf32>
    %165 = arith.addf %152, %164 : vector<16x128xf32>
    %166 = arith.addf %0, %165 : vector<16x128xf32>
    %167 = vector.extract_strided_slice %166 {offsets = [0, 0], sizes = [16, 32], strides = [1, 1]} : vector<16x128xf32> to vector<16x32xf32>
    %c0_75 = arith.constant 0 : index
    %c0_76 = arith.constant 0 : index
    %168 = vector.load %arg11[%c0_75, %c0_76] : memref<1x32xf32, #tpu.memory_space<vmem>>, vector<1x32xf32>
    %c0_77 = arith.constant 0 : index
    %c0_78 = arith.constant 0 : index
    %169 = vector.load %arg12[%c0_77, %c0_78] : memref<1x32xf32, #tpu.memory_space<vmem>>, vector<1x32xf32>
    %cst_79 = arith.constant dense<0.000000e+00> : vector<16xf32>
    %170 = vector.multi_reduction <add>, %167, %cst_79 [1] : vector<16x32xf32> to vector<16xf32>
    %171 = vector.shape_cast %170 : vector<16xf32> to vector<16x1xf32>
    %cst_80 = arith.constant 3.200000e+01 : f32
    %172 = vector.broadcast %cst_80 : f32 to vector<16x1xf32>
    %173 = arith.divf %171, %172 : vector<16x1xf32>
    %174 = arith.mulf %167, %167 : vector<16x32xf32>
    %cst_81 = arith.constant dense<0.000000e+00> : vector<16xf32>
    %175 = vector.multi_reduction <add>, %174, %cst_81 [1] : vector<16x32xf32> to vector<16xf32>
    %176 = vector.shape_cast %175 : vector<16xf32> to vector<16x1xf32>
    %cst_82 = arith.constant 3.200000e+01 : f32
    %177 = vector.broadcast %cst_82 : f32 to vector<16x1xf32>
    %178 = arith.divf %176, %177 : vector<16x1xf32>
    %179 = arith.mulf %173, %173 : vector<16x1xf32>
    %180 = arith.subf %178, %179 : vector<16x1xf32>
    %cst_83 = arith.constant 0.000000e+00 : f32
    %181 = vector.broadcast %cst_83 : f32 to vector<16x1xf32>
    %182 = arith.maximumf %180, %181 : vector<16x1xf32>
    %183 = vector.broadcast %173 : vector<16x1xf32> to vector<16x32xf32>
    %184 = arith.subf %167, %183 : vector<16x32xf32>
    %cst_84 = arith.constant 9.99999974E-6 : f32
    %185 = vector.broadcast %cst_84 : f32 to vector<16x1xf32>
    %186 = arith.addf %182, %185 : vector<16x1xf32>
    %187 = math.rsqrt %186 : vector<16x1xf32>
    %188 = vector.broadcast %187 : vector<16x1xf32> to vector<16x32xf32>
    %189 = arith.mulf %184, %188 : vector<16x32xf32>
    %190 = vector.broadcast %168 : vector<1x32xf32> to vector<16x32xf32>
    %191 = arith.mulf %189, %190 : vector<16x32xf32>
    %192 = vector.broadcast %169 : vector<1x32xf32> to vector<16x32xf32>
    %193 = arith.addf %191, %192 : vector<16x32xf32>
    %194 = arith.mulf %193, %193 : vector<16x32xf32>
    %195 = arith.mulf %193, %194 : vector<16x32xf32>
    %cst_85 = arith.constant 4.471500e-02 : f32
    %196 = vector.broadcast %cst_85 : f32 to vector<16x32xf32>
    %197 = arith.mulf %196, %195 : vector<16x32xf32>
    %198 = arith.addf %193, %197 : vector<16x32xf32>
    %cst_86 = arith.constant 0.797884583 : f32
    %199 = vector.broadcast %cst_86 : f32 to vector<16x32xf32>
    %200 = arith.mulf %199, %198 : vector<16x32xf32>
    %201 = math.tanh %200 : vector<16x32xf32>
    %cst_87 = arith.constant 1.000000e+00 : f32
    %202 = vector.broadcast %cst_87 : f32 to vector<16x32xf32>
    %203 = arith.addf %202, %201 : vector<16x32xf32>
    %cst_88 = arith.constant 5.000000e-01 : f32
    %204 = vector.broadcast %cst_88 : f32 to vector<16x32xf32>
    %205 = arith.mulf %204, %203 : vector<16x32xf32>
    %206 = arith.mulf %193, %205 : vector<16x32xf32>
    %207 = vector.extract_strided_slice %166 {offsets = [0, 32], sizes = [16, 48], strides = [1, 1]} : vector<16x128xf32> to vector<16x48xf32>
    %c0_89 = arith.constant 0 : index
    %c0_90 = arith.constant 0 : index
    %208 = vector.load %arg13[%c0_89, %c0_90] : memref<1x16xf32, #tpu.memory_space<vmem>>, vector<1x16xf32>
    %c0_91 = arith.constant 0 : index
    %c0_92 = arith.constant 0 : index
    %209 = vector.load %arg14[%c0_91, %c0_92] : memref<1x16xf32, #tpu.memory_space<vmem>>, vector<1x16xf32>
    %210 = vector.extract_strided_slice %207 {offsets = [0, 0], sizes = [16, 16], strides = [1, 1]} : vector<16x48xf32> to vector<16x16xf32>
    %211 = vector.extract_strided_slice %207 {offsets = [0, 16], sizes = [16, 16], strides = [1, 1]} : vector<16x48xf32> to vector<16x16xf32>
    %212 = vector.extract_strided_slice %207 {offsets = [0, 32], sizes = [16, 16], strides = [1, 1]} : vector<16x48xf32> to vector<16x16xf32>
    %213 = arith.mulf %210, %210 : vector<16x16xf32>
    %214 = arith.mulf %211, %211 : vector<16x16xf32>
    %215 = arith.addf %213, %214 : vector<16x16xf32>
    %216 = arith.mulf %212, %212 : vector<16x16xf32>
    %217 = arith.addf %215, %216 : vector<16x16xf32>
    %cst_93 = arith.constant 9.99999993E-9 : f32
    %218 = vector.broadcast %cst_93 : f32 to vector<16x16xf32>
    %219 = arith.addf %217, %218 : vector<16x16xf32>
    %220 = math.rsqrt %219 : vector<16x16xf32>
    %221 = arith.mulf %219, %220 : vector<16x16xf32>
    %cst_94 = arith.constant dense<0.000000e+00> : vector<16xf32>
    %222 = vector.multi_reduction <add>, %221, %cst_94 [1] : vector<16x16xf32> to vector<16xf32>
    %223 = vector.shape_cast %222 : vector<16xf32> to vector<16x1xf32>
    %cst_95 = arith.constant 1.600000e+01 : f32
    %224 = vector.broadcast %cst_95 : f32 to vector<16x1xf32>
    %225 = arith.divf %223, %224 : vector<16x1xf32>
    %cst_96 = arith.constant dense<0.000000e+00> : vector<16xf32>
    %226 = vector.multi_reduction <add>, %219, %cst_96 [1] : vector<16x16xf32> to vector<16xf32>
    %227 = vector.shape_cast %226 : vector<16xf32> to vector<16x1xf32>
    %cst_97 = arith.constant 1.600000e+01 : f32
    %228 = vector.broadcast %cst_97 : f32 to vector<16x1xf32>
    %229 = arith.divf %227, %228 : vector<16x1xf32>
    %230 = arith.mulf %225, %225 : vector<16x1xf32>
    %231 = arith.subf %229, %230 : vector<16x1xf32>
    %cst_98 = arith.constant 0.000000e+00 : f32
    %232 = vector.broadcast %cst_98 : f32 to vector<16x1xf32>
    %233 = arith.maximumf %231, %232 : vector<16x1xf32>
    %234 = vector.broadcast %225 : vector<16x1xf32> to vector<16x16xf32>
    %235 = arith.subf %221, %234 : vector<16x16xf32>
    %cst_99 = arith.constant 9.99999974E-6 : f32
    %236 = vector.broadcast %cst_99 : f32 to vector<16x1xf32>
    %237 = arith.addf %233, %236 : vector<16x1xf32>
    %238 = math.rsqrt %237 : vector<16x1xf32>
    %239 = vector.broadcast %238 : vector<16x1xf32> to vector<16x16xf32>
    %240 = arith.mulf %235, %239 : vector<16x16xf32>
    %241 = vector.broadcast %208 : vector<1x16xf32> to vector<16x16xf32>
    %242 = arith.mulf %240, %241 : vector<16x16xf32>
    %243 = vector.broadcast %209 : vector<1x16xf32> to vector<16x16xf32>
    %244 = arith.addf %242, %243 : vector<16x16xf32>
    %245 = arith.mulf %244, %244 : vector<16x16xf32>
    %246 = arith.mulf %244, %245 : vector<16x16xf32>
    %cst_100 = arith.constant 4.471500e-02 : f32
    %247 = vector.broadcast %cst_100 : f32 to vector<16x16xf32>
    %248 = arith.mulf %247, %246 : vector<16x16xf32>
    %249 = arith.addf %244, %248 : vector<16x16xf32>
    %cst_101 = arith.constant 0.797884583 : f32
    %250 = vector.broadcast %cst_101 : f32 to vector<16x16xf32>
    %251 = arith.mulf %250, %249 : vector<16x16xf32>
    %252 = math.tanh %251 : vector<16x16xf32>
    %cst_102 = arith.constant 1.000000e+00 : f32
    %253 = vector.broadcast %cst_102 : f32 to vector<16x16xf32>
    %254 = arith.addf %253, %252 : vector<16x16xf32>
    %cst_103 = arith.constant 5.000000e-01 : f32
    %255 = vector.broadcast %cst_103 : f32 to vector<16x16xf32>
    %256 = arith.mulf %255, %254 : vector<16x16xf32>
    %257 = arith.mulf %244, %256 : vector<16x16xf32>
    %258 = arith.mulf %257, %220 : vector<16x16xf32>
    %259 = arith.mulf %210, %258 : vector<16x16xf32>
    %260 = arith.mulf %211, %258 : vector<16x16xf32>
    %261 = arith.mulf %212, %258 : vector<16x16xf32>
    %262 = arith.truncf %206 : vector<16x32xf32> to vector<16x32xbf16>
    %c0_104 = arith.constant 0 : index
    %c0_105 = arith.constant 0 : index
    %263 = vector.load %arg15[%c0_104, %c0_105] : memref<32x128xbf16, #tpu.memory_space<vmem>>, vector<32x128xbf16>
    %cst_106 = arith.constant dense<0.000000e+00> : vector<16x128xf32>
    %264 = tpu.matmul %262, %263, %cst_106 {dimension_numbers = #tpu.dot_dimension_numbers<[1], [0], [0], [1], [0, 0, 1, 1], [], []>} : vector<16x32xbf16>, vector<32x128xbf16>, vector<16x128xf32> -> vector<16x128xf32>
    %c0_107 = arith.constant 0 : index
    %c0_108 = arith.constant 0 : index
    %265 = vector.load %arg16[%c0_107, %c0_108] : memref<1x128xf32, #tpu.memory_space<vmem>>, vector<1x128xf32>
    %266 = vector.broadcast %265 : vector<1x128xf32> to vector<16x128xf32>
    %267 = arith.addf %264, %266 : vector<16x128xf32>
    %268 = arith.mulf %267, %267 : vector<16x128xf32>
    %269 = arith.mulf %267, %268 : vector<16x128xf32>
    %cst_109 = arith.constant 4.471500e-02 : f32
    %270 = vector.broadcast %cst_109 : f32 to vector<16x128xf32>
    %271 = arith.mulf %270, %269 : vector<16x128xf32>
    %272 = arith.addf %267, %271 : vector<16x128xf32>
    %cst_110 = arith.constant 0.797884583 : f32
    %273 = vector.broadcast %cst_110 : f32 to vector<16x128xf32>
    %274 = arith.mulf %273, %272 : vector<16x128xf32>
    %275 = math.tanh %274 : vector<16x128xf32>
    %cst_111 = arith.constant 1.000000e+00 : f32
    %276 = vector.broadcast %cst_111 : f32 to vector<16x128xf32>
    %277 = arith.addf %276, %275 : vector<16x128xf32>
    %cst_112 = arith.constant 5.000000e-01 : f32
    %278 = vector.broadcast %cst_112 : f32 to vector<16x128xf32>
    %279 = arith.mulf %278, %277 : vector<16x128xf32>
    %280 = arith.mulf %267, %279 : vector<16x128xf32>
    %281 = arith.truncf %280 : vector<16x128xf32> to vector<16x128xbf16>
    %c0_113 = arith.constant 0 : index
    %c0_114 = arith.constant 0 : index
    %282 = vector.load %arg17[%c0_113, %c0_114] : memref<128x128xbf16, #tpu.memory_space<vmem>>, vector<128x128xbf16>
    %cst_115 = arith.constant dense<0.000000e+00> : vector<16x128xf32>
    %283 = tpu.matmul %281, %282, %cst_115 {dimension_numbers = #tpu.dot_dimension_numbers<[1], [0], [0], [1], [0, 0, 1, 1], [], []>} : vector<16x128xbf16>, vector<128x128xbf16>, vector<16x128xf32> -> vector<16x128xf32>
    %c0_116 = arith.constant 0 : index
    %c0_117 = arith.constant 0 : index
    %284 = vector.load %arg18[%c0_116, %c0_117] : memref<1x128xf32, #tpu.memory_space<vmem>>, vector<1x128xf32>
    %285 = vector.broadcast %284 : vector<1x128xf32> to vector<16x128xf32>
    %286 = arith.addf %283, %285 : vector<16x128xf32>
    %c0_118 = arith.constant 0 : index
    %c0_119 = arith.constant 0 : index
    %287 = vector.load %arg19[%c0_118, %c0_119] : memref<16x32xbf16, #tpu.memory_space<vmem>>, vector<16x32xbf16>
    %288 = arith.truncf %259 : vector<16x16xf32> to vector<16x16xbf16>
    %cst_120 = arith.constant dense<0.000000e+00> : vector<16x32xf32>
    %289 = tpu.matmul %288, %287, %cst_120 {dimension_numbers = #tpu.dot_dimension_numbers<[1], [0], [0], [1], [0, 0, 1, 1], [], []>} : vector<16x16xbf16>, vector<16x32xbf16>, vector<16x32xf32> -> vector<16x32xf32>
    %290 = arith.truncf %289 : vector<16x32xf32> to vector<16x32xbf16>
    %c0_121 = arith.constant 0 : index
    %c0_122 = arith.constant 0 : index
    %c0_123 = arith.constant 0 : index
    %291 = vector.load %arg20[%c0_121, %c0_122, %c0_123] : memref<3x32x128xbf16, #tpu.memory_space<vmem>>, vector<1x32x128xbf16>
    %292 = vector.shape_cast %291 : vector<1x32x128xbf16> to vector<32x128xbf16>
    %cst_124 = arith.constant dense<0.000000e+00> : vector<16x128xf32>
    %293 = tpu.matmul %290, %292, %cst_124 {dimension_numbers = #tpu.dot_dimension_numbers<[1], [0], [0], [1], [0, 0, 1, 1], [], []>} : vector<16x32xbf16>, vector<32x128xbf16>, vector<16x128xf32> -> vector<16x128xf32>
    %294 = arith.addf %286, %293 : vector<16x128xf32>
    %295 = arith.truncf %260 : vector<16x16xf32> to vector<16x16xbf16>
    %cst_125 = arith.constant dense<0.000000e+00> : vector<16x32xf32>
    %296 = tpu.matmul %295, %287, %cst_125 {dimension_numbers = #tpu.dot_dimension_numbers<[1], [0], [0], [1], [0, 0, 1, 1], [], []>} : vector<16x16xbf16>, vector<16x32xbf16>, vector<16x32xf32> -> vector<16x32xf32>
    %297 = arith.truncf %296 : vector<16x32xf32> to vector<16x32xbf16>
    %c1_126 = arith.constant 1 : index
    %c0_127 = arith.constant 0 : index
    %c0_128 = arith.constant 0 : index
    %298 = vector.load %arg20[%c1_126, %c0_127, %c0_128] : memref<3x32x128xbf16, #tpu.memory_space<vmem>>, vector<1x32x128xbf16>
    %299 = vector.shape_cast %298 : vector<1x32x128xbf16> to vector<32x128xbf16>
    %cst_129 = arith.constant dense<0.000000e+00> : vector<16x128xf32>
    %300 = tpu.matmul %297, %299, %cst_129 {dimension_numbers = #tpu.dot_dimension_numbers<[1], [0], [0], [1], [0, 0, 1, 1], [], []>} : vector<16x32xbf16>, vector<32x128xbf16>, vector<16x128xf32> -> vector<16x128xf32>
    %301 = arith.addf %294, %300 : vector<16x128xf32>
    %302 = arith.truncf %261 : vector<16x16xf32> to vector<16x16xbf16>
    %cst_130 = arith.constant dense<0.000000e+00> : vector<16x32xf32>
    %303 = tpu.matmul %302, %287, %cst_130 {dimension_numbers = #tpu.dot_dimension_numbers<[1], [0], [0], [1], [0, 0, 1, 1], [], []>} : vector<16x16xbf16>, vector<16x32xbf16>, vector<16x32xf32> -> vector<16x32xf32>
    %304 = arith.truncf %303 : vector<16x32xf32> to vector<16x32xbf16>
    %c2_131 = arith.constant 2 : index
    %c0_132 = arith.constant 0 : index
    %c0_133 = arith.constant 0 : index
    %305 = vector.load %arg20[%c2_131, %c0_132, %c0_133] : memref<3x32x128xbf16, #tpu.memory_space<vmem>>, vector<1x32x128xbf16>
    %306 = vector.shape_cast %305 : vector<1x32x128xbf16> to vector<32x128xbf16>
    %cst_134 = arith.constant dense<0.000000e+00> : vector<16x128xf32>
    %307 = tpu.matmul %304, %306, %cst_134 {dimension_numbers = #tpu.dot_dimension_numbers<[1], [0], [0], [1], [0, 0, 1, 1], [], []>} : vector<16x32xbf16>, vector<32x128xbf16>, vector<16x128xf32> -> vector<16x128xf32>
    %308 = arith.addf %301, %307 : vector<16x128xf32>
    %309 = arith.addf %166, %308 : vector<16x128xf32>
    %c0_135 = arith.constant 0 : index
    %c0_136 = arith.constant 0 : index
    %310 = vector.load %arg21[%c0_135, %c0_136] : memref<16x128xf32, #tpu.memory_space<vmem>>, vector<16x128xf32>
    tpu.vector_store %arg21[%c0_135, %c0_136], %309 {strides = array<i32>} : memref<16x128xf32, #tpu.memory_space<vmem>>, vector<16x128xf32>,
    return
  }
}

</mosaic_0001>

<llo_original>
// kernel: attention_layer_forward.1
$region0: #{attention_layer_forward.1}
  #allocation0 [shape = 'u32[]', space=smem, size = 0x4, offset = 0x4, fixed_abs, tag = 'smem constant byte address 0x4 - core index']
  #allocation1 [shape = 'u32[72,128]{1,0:T(1,128)}', space=vmem, size = 0x9000, scoped, tag = 'internal scratch']
  %s0 = inlined_call_operand.vmem [shape: f32[16,128], index: 0, kind: input, shape index: {}]
  %s1 = inlined_call_operand.vmem [shape: f32[1,32], index: 1, kind: input, shape index: {}]
  %s2 = inlined_call_operand.vmem [shape: f32[1,32], index: 2, kind: input, shape index: {}]
  %s3 = inlined_call_operand.vmem [shape: f32[1,16], index: 3, kind: input, shape index: {}]
  %s4 = inlined_call_operand.vmem [shape: f32[1,16], index: 4, kind: input, shape index: {}]
  %s5 = inlined_call_operand.vmem [shape: bf16[4,32,8], index: 5, kind: input, shape index: {}]
  %s6 = inlined_call_operand.vmem [shape: bf16[4,32,8], index: 6, kind: input, shape index: {}]
  %s7 = inlined_call_operand.vmem [shape: bf16[4,32,8], index: 7, kind: input, shape index: {}]
  %s8 = inlined_call_operand.vmem [shape: bf16[4,16,4], index: 8, kind: input, shape index: {}]
  %s9 = inlined_call_operand.vmem [shape: bf16[4,8,128], index: 9, kind: input, shape index: {}]
  %s10 = inlined_call_operand.vmem [shape: bf16[3,4,4,128], index: 10, kind: input, shape index: {}]
  %s11 = inlined_call_operand.vmem [shape: f32[1,32], index: 11, kind: input, shape index: {}]
  %s12 = inlined_call_operand.vmem [shape: f32[1,32], index: 12, kind: input, shape index: {}]
  %s13 = inlined_call_operand.vmem [shape: f32[1,16], index: 13, kind: input, shape index: {}]
  %s14 = inlined_call_operand.vmem [shape: f32[1,16], index: 14, kind: input, shape index: {}]
  %s15 = inlined_call_operand.vmem [shape: bf16[32,128], index: 15, kind: input, shape index: {}]
  %s16 = inlined_call_operand.vmem [shape: f32[1,128], index: 16, kind: input, shape index: {}]
  %s17 = inlined_call_operand.vmem [shape: bf16[128,128], index: 17, kind: input, shape index: {}]
  %s18 = inlined_call_operand.vmem [shape: f32[1,128], index: 18, kind: input, shape index: {}]
  %s19 = inlined_call_operand.vmem [shape: bf16[16,32], index: 19, kind: input, shape index: {}]
  %s20 = inlined_call_operand.vmem [shape: bf16[3,32,128], index: 20, kind: input, shape index: {}]
  %s21 = inlined_call_operand.vmem [shape: f32[16,128], index: 21, kind: output, shape index: {}]
  %s22 = sld [smem:[#allocation0]]
  $region94: #{attention_layer_forward.1} parent=0
    _
  %s24 = ssub.s32 1, %s22
  %s25 = scalar_select 0, %s24, %s22
  // Predicated region
  $region2: #{attention_layer_forward.1} parent=0 // pred_check
    _
  $region3: #{attention_layer_forward.1} parent=0 // pred_check_branch
    %27 = sbr.rel (0) target = $region5
  $region4: #{attention_layer_forward.1} parent=0 // pred_region
    _
  $region5: #{attention_layer_forward.1} parent=0 // pred_fallthru
    _
  // Predicated region
  $region6: #{attention_layer_forward.1} parent=0 // pred_check
    _
  $region7: #{attention_layer_forward.1} parent=0 // pred_check_branch
    %29 = sbr.rel (0) target = $region9
  $region8: #{attention_layer_forward.1} parent=0 // pred_region
    _
  $region9: #{attention_layer_forward.1} parent=0 // pred_fallthru
    _
  // Predicated region
  $region10: #{attention_layer_forward.1} parent=0 // pred_check
    _
  $region11: #{attention_layer_forward.1} parent=0 // pred_check_branch
    %31 = sbr.rel (0) target = $region13
  $region12: #{attention_layer_forward.1} parent=0 // pred_region
    _
  $region13: #{attention_layer_forward.1} parent=0 // pred_fallthru
    _
  // Predicated region
  $region14: #{attention_layer_forward.1} parent=0 // pred_check
    _
  $region15: #{attention_layer_forward.1} parent=0 // pred_check_branch
    %33 = sbr.rel (0) target = $region17
  $region16: #{attention_layer_forward.1} parent=0 // pred_region
    _
  $region17: #{attention_layer_forward.1} parent=0 // pred_fallthru
    _
  // Predicated region
  $region18: #{attention_layer_forward.1} parent=0 // pred_check
    _
  $region19: #{attention_layer_forward.1} parent=0 // pred_check_branch
    %35 = sbr.rel (0) target = $region21
  $region20: #{attention_layer_forward.1} parent=0 // pred_region
    _
  $region21: #{attention_layer_forward.1} parent=0 // pred_fallthru
    _
  // Predicated region
  $region22: #{attention_layer_forward.1} parent=0 // pred_check
    _
  $region23: #{attention_layer_forward.1} parent=0 // pred_check_branch
    %37 = sbr.rel (0) target = $region25
  $region24: #{attention_layer_forward.1} parent=0 // pred_region
    _
  $region25: #{attention_layer_forward.1} parent=0 // pred_fallthru
    _
  // Predicated region
  $region26: #{attention_layer_forward.1} parent=0 // pred_check
    _
  $region27: #{attention_layer_forward.1} parent=0 // pred_check_branch
    %39 = sbr.rel (0) target = $region29
  $region28: #{attention_layer_forward.1} parent=0 // pred_region
    _
  $region29: #{attention_layer_forward.1} parent=0 // pred_fallthru
    _
  // Predicated region
  $region30: #{attention_layer_forward.1} parent=0 // pred_check
    _
  $region31: #{attention_layer_forward.1} parent=0 // pred_check_branch
    %41 = sbr.rel (0) target = $region33
  $region32: #{attention_layer_forward.1} parent=0 // pred_region
    _
  $region33: #{attention_layer_forward.1} parent=0 // pred_fallthru
    _
  // Predicated region
  $region34: #{attention_layer_forward.1} parent=0 // pred_check
    _
  $region35: #{attention_layer_forward.1} parent=0 // pred_check_branch
    %43 = sbr.rel (0) target = $region37
  $region36: #{attention_layer_forward.1} parent=0 // pred_region
    _
  $region37: #{attention_layer_forward.1} parent=0 // pred_fallthru
    _
  // Predicated region
  $region38: #{attention_layer_forward.1} parent=0 // pred_check
    _
  $region39: #{attention_layer_forward.1} parent=0 // pred_check_branch
    %45 = sbr.rel (0) target = $region41
  $region40: #{attention_layer_forward.1} parent=0 // pred_region
    _
  $region41: #{attention_layer_forward.1} parent=0 // pred_fallthru
    _
  // Predicated region
  $region42: #{attention_layer_forward.1} parent=0 // pred_check
    _
  $region43: #{attention_layer_forward.1} parent=0 // pred_check_branch
    %47 = sbr.rel (0) target = $region45
  $region44: #{attention_layer_forward.1} parent=0 // pred_region
    _
  $region45: #{attention_layer_forward.1} parent=0 // pred_fallthru
    _
  // Predicated region
  $region46: #{attention_layer_forward.1} parent=0 // pred_check
    _
  $region47: #{attention_layer_forward.1} parent=0 // pred_check_branch
    %49 = sbr.rel (0) target = $region49
  $region48: #{attention_layer_forward.1} parent=0 // pred_region
    _
  $region49: #{attention_layer_forward.1} parent=0 // pred_fallthru
    _
  // Predicated region
  $region50: #{attention_layer_forward.1} parent=0 // pred_check
    _
  $region51: #{attention_layer_forward.1} parent=0 // pred_check_branch
    %51 = sbr.rel (0) target = $region53
  $region52: #{attention_layer_forward.1} parent=0 // pred_region
    _
  $region53: #{attention_layer_forward.1} parent=0 // pred_fallthru
    _
  // Predicated region
  $region54: #{attention_layer_forward.1} parent=0 // pred_check
    _
  $region55: #{attention_layer_forward.1} parent=0 // pred_check_branch
    %53 = sbr.rel (0) target = $region57
  $region56: #{attention_layer_forward.1} parent=0 // pred_region
    _
  $region57: #{attention_layer_forward.1} parent=0 // pred_fallthru
    _
  // Predicated region
  $region58: #{attention_layer_forward.1} parent=0 // pred_check
    _
  $region59: #{attention_layer_forward.1} parent=0 // pred_check_branch
    %55 = sbr.rel (0) target = $region61
  $region60: #{attention_layer_forward.1} parent=0 // pred_region
    _
  $region61: #{attention_layer_forward.1} parent=0 // pred_fallthru
    _
  // Predicated region
  $region62: #{attention_layer_forward.1} parent=0 // pred_check
    _
  $region63: #{attention_layer_forward.1} parent=0 // pred_check_branch
    %57 = sbr.rel (0) target = $region65
  $region64: #{attention_layer_forward.1} parent=0 // pred_region
    _
  $region65: #{attention_layer_forward.1} parent=0 // pred_fallthru
    _
  // Predicated region
  $region66: #{attention_layer_forward.1} parent=0 // pred_check
    _
  $region67: #{attention_layer_forward.1} parent=0 // pred_check_branch
    %59 = sbr.rel (0) target = $region69
  $region68: #{attention_layer_forward.1} parent=0 // pred_region
    _
  $region69: #{attention_layer_forward.1} parent=0 // pred_fallthru
    _
  // Predicated region
  $region70: #{attention_layer_forward.1} parent=0 // pred_check
    _
  $region71: #{attention_layer_forward.1} parent=0 // pred_check_branch
    %61 = sbr.rel (0) target = $region73
  $region72: #{attention_layer_forward.1} parent=0 // pred_region
    _
  $region73: #{attention_layer_forward.1} parent=0 // pred_fallthru
    _
  // Predicated region
  $region74: #{attention_layer_forward.1} parent=0 // pred_check
    _
  $region75: #{attention_layer_forward.1} parent=0 // pred_check_branch
    %63 = sbr.rel (0) target = $region77
  $region76: #{attention_layer_forward.1} parent=0 // pred_region
    _
  $region77: #{attention_layer_forward.1} parent=0 // pred_fallthru
    _
  // Predicated region
  $region78: #{attention_layer_forward.1} parent=0 // pred_check
    _
  $region79: #{attention_layer_forward.1} parent=0 // pred_check_branch
    %65 = sbr.rel (0) target = $region81
  $region80: #{attention_layer_forward.1} parent=0 // pred_region
    _
  $region81: #{attention_layer_forward.1} parent=0 // pred_fallthru
    _
  // Predicated region
  $region82: #{attention_layer_forward.1} parent=0 // pred_check
    _
  $region83: #{attention_layer_forward.1} parent=0 // pred_check_branch
    %67 = sbr.rel (0) target = $region85
  $region84: #{attention_layer_forward.1} parent=0 // pred_region
    _
  $region85: #{attention_layer_forward.1} parent=0 // pred_fallthru
    _
  %v69 = vld [vmem:[%s0] sm:$0xff]
  %v70 = vld [vmem:[%s0 + $0x8] sm:$0xff]
  %v71 = vld [vmem:[%s1] sm:$0x1]
  %v72 = vld [vmem:[%s2] sm:$0x1]
  %vm73 = vcmask 261120
  %v74 = vsel %vm73, %v69, 0.0
  %75 = vadd.xlane.f32.xlu0 %v74
  %v76 = vpop.xlane.xlu0 %75
  %v77 = vsel %vm73, %v70, 0.0
  %78 = vadd.xlane.f32.xlu0 %v77
  %v79 = vpop.xlane.xlu0 %78
  %v80 = vrcp.pop 32.0
  %v81 = vmul.f32 32.0, %v80
  %v82 = vsub.f32 1.0, %v81
  %v83 = vmul.f32 %v80, %v82
  %v84 = vadd.f32 %v80, %v83
  %vm85 = vweird.f32 %v80
  %v86 = vsel %vm85, %v80, %v84
  %v87 = vmul.f32 %v76, %v86
  %v88 = vmul.f32 %v79, %v86
  %v89 = vmul.f32 %v69, %v69
  %v90 = vmul.f32 %v70, %v70
  %v91 = vsel %vm73, %v89, 0.0
  %92 = vadd.xlane.f32.xlu0 %v91
  %v93 = vpop.xlane.xlu0 %92
  %v94 = vsel %vm73, %v90, 0.0
  %95 = vadd.xlane.f32.xlu0 %v94
  %v96 = vpop.xlane.xlu0 %95
  %v97 = vmul.f32 %v93, %v86
  %v98 = vmul.f32 %v96, %v86
  %v99 = vmul.f32 %v87, %v87
  %v100 = vmul.f32 %v88, %v88
  %v101 = vsub.f32 %v97, %v99
  %v102 = vsub.f32 %v98, %v100
  %v103 = vmax.f32 %v101, 0.0
  %v104 = vmax.f32 %v102, 0.0
  %v105 = vsub.f32 %v69, %v87
  %v106 = vsub.f32 %v70, %v88
  %v107 = vadd.f32 %v103, 1e-05
  %v108 = vadd.f32 %v104, 1e-05
  %v109 = vrsqrt.pop %v107
  %v110 = vmul.f32 %v109, %v107
  %v111 = vmul.f32 %v110, %v109
  %v112 = vmul.f32 0.5, %v111
  %v113 = vsub.f32 1.5, %v112
  %v114 = vmul.f32 %v109, %v113
  %vm115 = vweird.f32 %v107
  %vm116 = vweird.f32 %v109
  %vm117 = vmor %vm115, %vm116
  %v118 = vsel %vm117, %v109, %v114
  %v119 = vrsqrt.pop %v108
  %v120 = vmul.f32 %v119, %v108
  %v121 = vmul.f32 %v120, %v119
  %v122 = vmul.f32 0.5, %v121
  %v123 = vsub.f32 1.5, %v122
  %v124 = vmul.f32 %v119, %v123
  %vm125 = vweird.f32 %v108
  %vm126 = vweird.f32 %v119
  %vm127 = vmor %vm125, %vm126
  %v128 = vsel %vm127, %v119, %v124
  %v129 = vmul.f32 %v105, %v118
  %v130 = vmul.f32 %v106, %v128
  %v132 = vperm.slane %v71, 0
  %v134 = vmul.f32 %v129, %v132
  %v135 = vmul.f32 %v130, %v132
  %v137 = vperm.slane %v72, 0
  %v139 = vadd.f32 %v134, %v137
  %v140 = vadd.f32 %v135, %v137
  %v141 = vmul.f32 %v139, %v139
  %v142 = vmul.f32 %v140, %v140
  %v143 = vmul.f32 %v139, %v141
  %v144 = vmul.f32 %v140, %v142
  %v145 = vmul.f32 %v143, 0.044715
  %v146 = vmul.f32 %v144, 0.044715
  %v147 = vadd.f32 %v139, %v145
  %v148 = vadd.f32 %v140, %v146
  %v149 = vmul.f32 %v147, 0.7978846
  %v150 = vmul.f32 %v148, 0.7978846
  %v151 = vtanh.pop %v149
  %v152 = vtanh.pop %v150
  %v153 = vadd.f32 %v151, 1.0
  %v154 = vadd.f32 %v152, 1.0
  %v155 = vmul.f32 %v153, 0.5
  %v156 = vmul.f32 %v154, 0.5
  %v157 = vmul.f32 %v139, %v155
  %v158 = vmul.f32 %v140, %v156
  %v159 = vld [vmem:[%s3] sm:$0x1]
  %v160 = vld [vmem:[%s4] sm:$0x1]
  %163 = vrot.lane.b32.xlu0 %v89, 112
  %v164 = vpop.permute.xlu0 %163
  %165 = vrot.lane.b32.xlu0 %v90, 112
  %v166 = vpop.permute.xlu0 %165
  %v169 = vadd.f32 %v89, %v164
  %v170 = vadd.f32 %v90, %v166
  %171 = vrot.lane.b32.xlu0 %v89, 96
  %v172 = vpop.permute.xlu0 %171
  %173 = vrot.lane.b32.xlu0 %v90, 96
  %v174 = vpop.permute.xlu0 %173
  %v177 = vadd.f32 %v169, %v172
  %v178 = vadd.f32 %v170, %v174
  %v179 = vadd.f32 %v177, 1e-08
  %v180 = vadd.f32 %v178, 1e-08
  %v181 = vrsqrt.pop %v179
  %v182 = vmul.f32 %v181, %v179
  %v183 = vmul.f32 %v182, %v181
  %v184 = vmul.f32 0.5, %v183
  %v185 = vsub.f32 1.5, %v184
  %v186 = vmul.f32 %v181, %v185
  %vm187 = vweird.f32 %v179
  %vm188 = vweird.f32 %v181
  %vm189 = vmor %vm187, %vm188
  %v190 = vsel %vm189, %v181, %v186
  %v191 = vrsqrt.pop %v180
  %v192 = vmul.f32 %v191, %v180
  %v193 = vmul.f32 %v192, %v191
  %v194 = vmul.f32 0.5, %v193
  %v195 = vsub.f32 1.5, %v194
  %v196 = vmul.f32 %v191, %v195
  %vm197 = vweird.f32 %v180
  %vm198 = vweird.f32 %v191
  %vm199 = vmor %vm197, %vm198
  %v200 = vsel %vm199, %v191, %v196
  %v201 = vmul.f32 %v179, %v190
  %v202 = vmul.f32 %v180, %v200
  %205 = vrot.lane.b32.xlu0 %v201, 96
  %v206 = vpop.permute.xlu0 %205
  %207 = vrot.lane.b32.xlu0 %v202, 96
  %v208 = vpop.permute.xlu0 %207
  %vm211 = vcmask 130048
  %v212 = vsel %vm211, %v206, 0.0
  %213 = vadd.xlane.f32.xlu0 %v212
  %v214 = vpop.xlane.xlu0 %213
  %v215 = vsel %vm211, %v208, 0.0
  %216 = vadd.xlane.f32.xlu0 %v215
  %v217 = vpop.xlane.xlu0 %216
  %v218 = vrcp.pop 16.0
  %v219 = vmul.f32 16.0, %v218
  %v220 = vsub.f32 1.0, %v219
  %v221 = vmul.f32 %v218, %v220
  %v222 = vadd.f32 %v218, %v221
  %vm223 = vweird.f32 %v218
  %v224 = vsel %vm223, %v218, %v222
  %v225 = vmul.f32 %v214, %v224
  %v226 = vmul.f32 %v217, %v224
  %229 = vrot.lane.b32.xlu0 %v179, 96
  %v230 = vpop.permute.xlu0 %229
  %231 = vrot.lane.b32.xlu0 %v180, 96
  %v232 = vpop.permute.xlu0 %231
  %v235 = vsel %vm211, %v230, 0.0
  %236 = vadd.xlane.f32.xlu0 %v235
  %v237 = vpop.xlane.xlu0 %236
  %v238 = vsel %vm211, %v232, 0.0
  %239 = vadd.xlane.f32.xlu0 %v238
  %v240 = vpop.xlane.xlu0 %239
  %v241 = vmul.f32 %v237, %v224
  %v242 = vmul.f32 %v240, %v224
  %v243 = vmul.f32 %v225, %v225
  %v244 = vmul.f32 %v226, %v226
  %v245 = vsub.f32 %v241, %v243
  %v246 = vsub.f32 %v242, %v244
  %v247 = vmax.f32 %v245, 0.0
  %v248 = vmax.f32 %v246, 0.0
  %v249 = vsub.f32 %v201, %v225
  %v250 = vsub.f32 %v202, %v226
  %v251 = vadd.f32 %v247, 1e-05
  %v252 = vadd.f32 %v248, 1e-05
  %v253 = vrsqrt.pop %v251
  %v254 = vmul.f32 %v253, %v251
  %v255 = vmul.f32 %v254, %v253
  %v256 = vmul.f32 0.5, %v255
  %v257 = vsub.f32 1.5, %v256
  %v258 = vmul.f32 %v253, %v257
  %vm259 = vweird.f32 %v251
  %vm260 = vweird.f32 %v253
  %vm261 = vmor %vm259, %vm260
  %v262 = vsel %vm261, %v253, %v258
  %v263 = vrsqrt.pop %v252
  %v264 = vmul.f32 %v263, %v252
  %v265 = vmul.f32 %v264, %v263
  %v266 = vmul.f32 0.5, %v265
  %v267 = vsub.f32 1.5, %v266
  %v268 = vmul.f32 %v263, %v267
  %vm269 = vweird.f32 %v252
  %vm270 = vweird.f32 %v263
  %vm271 = vmor %vm269, %vm270
  %v272 = vsel %vm271, %v263, %v268
  %v273 = vmul.f32 %v249, %v262
  %v274 = vmul.f32 %v250, %v272
  %v276 = vperm.slane %v159, 0
  %277 = vrot.lane.b32.xlu0 %v276, 32
  %v278 = vpop.permute.xlu0 %277
  %v280 = vmul.f32 %v273, %v278
  %v281 = vmul.f32 %v274, %v278
  %v283 = vperm.slane %v160, 0
  %284 = vrot.lane.b32.xlu0 %v283, 32
  %v285 = vpop.permute.xlu0 %284
  %v287 = vadd.f32 %v280, %v285
  %v288 = vadd.f32 %v281, %v285
  %v289 = vmul.f32 %v287, %v287
  %v290 = vmul.f32 %v288, %v288
  %v291 = vmul.f32 %v287, %v289
  %v292 = vmul.f32 %v288, %v290
  %v293 = vmul.f32 %v291, 0.044715
  %v294 = vmul.f32 %v292, 0.044715
  %v295 = vadd.f32 %v287, %v293
  %v296 = vadd.f32 %v288, %v294
  %v297 = vmul.f32 %v295, 0.7978846
  %v298 = vmul.f32 %v296, 0.7978846
  %v299 = vtanh.pop %v297
  %v300 = vtanh.pop %v298
  %v301 = vadd.f32 %v299, 1.0
  %v302 = vadd.f32 %v300, 1.0
  %v303 = vmul.f32 %v301, 0.5
  %v304 = vmul.f32 %v302, 0.5
  %v305 = vmul.f32 %v287, %v303
  %v306 = vmul.f32 %v288, %v304
  %v307 = vmul.f32 %v305, %v190
  %v308 = vmul.f32 %v306, %v200
  %v309 = vmul.f32 %v69, %v307
  %v310 = vmul.f32 %v70, %v308
  %313 = vrot.lane.b32.xlu0 %v307, 16
  %v314 = vpop.permute.xlu0 %313
  %315 = vrot.lane.b32.xlu0 %v308, 16
  %v316 = vpop.permute.xlu0 %315
  %v319 = vmul.f32 %v69, %v314
  %v320 = vmul.f32 %v70, %v316
  %321 = vrot.lane.b32.xlu0 %v307, 32
  %v322 = vpop.permute.xlu0 %321
  %323 = vrot.lane.b32.xlu0 %v308, 32
  %v324 = vpop.permute.xlu0 %323
  %v327 = vmul.f32 %v69, %v322
  %v328 = vmul.f32 %v70, %v324
  %v329 = vpack.c.bf16 %v157, %v157
  %v330 = vpack.c.bf16 %v158, %v158
  %v331 = vld [vmem:[%s5] sm:$0xf]
  %v332 = vld [vmem:[%s5 + $0x4] sm:$0xf]
  %v333 = vld [vmem:[%s5 + $0x8] sm:$0xf]
  %v334 = vld [vmem:[%s5 + $0xc] sm:$0xf]
  %v335 = vld [vmem:[%s5 + $0x10] sm:$0xf]
  %v336 = vld [vmem:[%s5 + $0x14] sm:$0xf]
  %v337 = vld [vmem:[%s5 + $0x18] sm:$0xf]
  %v338 = vld [vmem:[%s5 + $0x1c] sm:$0xf]
  %v339 = vld [vmem:[%s5 + $0x20] sm:$0xf]
  %v340 = vld [vmem:[%s5 + $0x24] sm:$0xf]
  %v341 = vld [vmem:[%s5 + $0x28] sm:$0xf]
  %v342 = vld [vmem:[%s5 + $0x2c] sm:$0xf]
  %v343 = vld [vmem:[%s5 + $0x30] sm:$0xf]
  %v344 = vld [vmem:[%s5 + $0x34] sm:$0xf]
  %v345 = vld [vmem:[%s5 + $0x38] sm:$0xf]
  %v346 = vld [vmem:[%s5 + $0x3c] sm:$0xf]
  %v349 = vunpack.c.l.b16 %v329
  %v350 = vunpack.c.l.b16 %v330
  %v351 = vpack.c.b16 %v350, %v349
  %v356 = vunpack.c.l.b16 %v331
  %v357 = vunpack.c.l.b16 %v332
  %v358 = vunpack.c.l.b16 %v333
  %v359 = vunpack.c.l.b16 %v334
  %v360 = vpack.c.b16 %v357, %v356
  %v361 = vpack.c.b16 %v359, %v358
  %v365 = vsel %vm73, %v351, 0
  %367 = vmatpush.bf16.msra.mxu0 0
  %368 = vmatpush.bf16.msra.mxu0 0
  %369 = vmatpush.bf16.msra.mxu0 0
  %370 = vmatpush.bf16.msra.mxu0 0
  %371 = vmatpush.bf16.msra.mxu0 0
  %372 = vmatpush.bf16.msra.mxu0 0
  %373 = vmatpush.bf16.msra.mxu0 %v361
  %374 = vmatpush.bf16.msra.mxu0 %v360
  %375 = vmatmul.bf16.gmra.mxu0 %v365
  %v376 = vpop.f32.mrf.mxu0
  %v377 = vadd.f32 0.0, %v376
  %v378 = vpop.f32.mrf.mxu0
  %v379 = vadd.f32 0.0, %v378
  %380 = vdwg.mxu0
  %v385 = vunpack.c.l.b16 %v335
  %v386 = vunpack.c.l.b16 %v336
  %v387 = vunpack.c.l.b16 %v337
  %v388 = vunpack.c.l.b16 %v338
  %v389 = vpack.c.b16 %v386, %v385
  %v390 = vpack.c.b16 %v388, %v387
  %393 = vmatpush.bf16.msra.mxu0 0
  %394 = vmatpush.bf16.msra.mxu0 0
  %395 = vmatpush.bf16.msra.mxu0 0
  %396 = vmatpush.bf16.msra.mxu0 0
  %397 = vmatpush.bf16.msra.mxu0 0
  %398 = vmatpush.bf16.msra.mxu0 0
  %399 = vmatpush.bf16.msra.mxu0 %v390
  %400 = vmatpush.bf16.msra.mxu0 %v389
  %401 = vmatmul.bf16.gmra.mxu0 %v365
  %v402 = vpop.f32.mrf.mxu0
  %v403 = vadd.f32 0.0, %v402
  %v404 = vpop.f32.mrf.mxu0
  %v405 = vadd.f32 0.0, %v404
  %406 = vdwg.mxu0
  %v411 = vunpack.c.l.b16 %v339
  %v412 = vunpack.c.l.b16 %v340
  %v413 = vunpack.c.l.b16 %v341
  %v414 = vunpack.c.l.b16 %v342
  %v415 = vpack.c.b16 %v412, %v411
  %v416 = vpack.c.b16 %v414, %v413
  %419 = vmatpush.bf16.msra.mxu0 0
  %420 = vmatpush.bf16.msra.mxu0 0
  %421 = vmatpush.bf16.msra.mxu0 0
  %422 = vmatpush.bf16.msra.mxu0 0
  %423 = vmatpush.bf16.msra.mxu0 0
  %424 = vmatpush.bf16.msra.mxu0 0
  %425 = vmatpush.bf16.msra.mxu0 %v416
  %426 = vmatpush.bf16.msra.mxu0 %v415
  %427 = vmatmul.bf16.gmra.mxu0 %v365
  %v428 = vpop.f32.mrf.mxu0
  %v429 = vadd.f32 0.0, %v428
  %v430 = vpop.f32.mrf.mxu0
  %v431 = vadd.f32 0.0, %v430
  %432 = vdwg.mxu0
  %v437 = vunpack.c.l.b16 %v343
  %v438 = vunpack.c.l.b16 %v344
  %v439 = vunpack.c.l.b16 %v345
  %v440 = vunpack.c.l.b16 %v346
  %v441 = vpack.c.b16 %v438, %v437
  %v442 = vpack.c.b16 %v440, %v439
  %445 = vmatpush.bf16.msra.mxu0 0
  %446 = vmatpush.bf16.msra.mxu0 0
  %447 = vmatpush.bf16.msra.mxu0 0
  %448 = vmatpush.bf16.msra.mxu0 0
  %449 = vmatpush.bf16.msra.mxu0 0
  %450 = vmatpush.bf16.msra.mxu0 0
  %451 = vmatpush.bf16.msra.mxu0 %v442
  %452 = vmatpush.bf16.msra.mxu0 %v441
  %453 = vmatmul.bf16.gmra.mxu0 %v365
  %v454 = vpop.f32.mrf.mxu0
  %v455 = vadd.f32 0.0, %v454
  %v456 = vpop.f32.mrf.mxu0
  %v457 = vadd.f32 0.0, %v456
  %458 = vdwg.mxu0
  %v459 = vld [vmem:[%s6] sm:$0xf]
  %v460 = vld [vmem:[%s6 + $0x4] sm:$0xf]
  %v461 = vld [vmem:[%s6 + $0x8] sm:$0xf]
  %v462 = vld [vmem:[%s6 + $0xc] sm:$0xf]
  %v463 = vld [vmem:[%s6 + $0x10] sm:$0xf]
  %v464 = vld [vmem:[%s6 + $0x14] sm:$0xf]
  %v465 = vld [vmem:[%s6 + $0x18] sm:$0xf]
  %v466 = vld [vmem:[%s6 + $0x1c] sm:$0xf]
  %v467 = vld [vmem:[%s6 + $0x20] sm:$0xf]
  %v468 = vld [vmem:[%s6 + $0x24] sm:$0xf]
  %v469 = vld [vmem:[%s6 + $0x28] sm:$0xf]
  %v470 = vld [vmem:[%s6 + $0x2c] sm:$0xf]
  %v471 = vld [vmem:[%s6 + $0x30] sm:$0xf]
  %v472 = vld [vmem:[%s6 + $0x34] sm:$0xf]
  %v473 = vld [vmem:[%s6 + $0x38] sm:$0xf]
  %v474 = vld [vmem:[%s6 + $0x3c] sm:$0xf]
  %v479 = vunpack.c.l.b16 %v459
  %v480 = vunpack.c.l.b16 %v460
  %v481 = vunpack.c.l.b16 %v461
  %v482 = vunpack.c.l.b16 %v462
  %v483 = vpack.c.b16 %v480, %v479
  %v484 = vpack.c.b16 %v482, %v481
  %487 = vmatpush.bf16.msra.mxu0 0
  %488 = vmatpush.bf16.msra.mxu0 0
  %489 = vmatpush.bf16.msra.mxu0 0
  %490 = vmatpush.bf16.msra.mxu0 0
  %491 = vmatpush.bf16.msra.mxu0 0
  %492 = vmatpush.bf16.msra.mxu0 0
  %493 = vmatpush.bf16.msra.mxu0 %v484
  %494 = vmatpush.bf16.msra.mxu0 %v483
  %495 = vmatmul.bf16.gmra.mxu0 %v365
  %v496 = vpop.f32.mrf.mxu0
  %v497 = vadd.f32 0.0, %v496
  %v498 = vpop.f32.mrf.mxu0
  %v499 = vadd.f32 0.0, %v498
  %500 = vdwg.mxu0
  %v505 = vunpack.c.l.b16 %v463
  %v506 = vunpack.c.l.b16 %v464
  %v507 = vunpack.c.l.b16 %v465
  %v508 = vunpack.c.l.b16 %v466
  %v509 = vpack.c.b16 %v506, %v505
  %v510 = vpack.c.b16 %v508, %v507
  %513 = vmatpush.bf16.msra.mxu0 0
  %514 = vmatpush.bf16.msra.mxu0 0
  %515 = vmatpush.bf16.msra.mxu0 0
  %516 = vmatpush.bf16.msra.mxu0 0
  %517 = vmatpush.bf16.msra.mxu0 0
  %518 = vmatpush.bf16.msra.mxu0 0
  %519 = vmatpush.bf16.msra.mxu0 %v510
  %520 = vmatpush.bf16.msra.mxu0 %v509
  %521 = vmatmul.bf16.gmra.mxu0 %v365
  %v522 = vpop.f32.mrf.mxu0
  %v523 = vadd.f32 0.0, %v522
  %v524 = vpop.f32.mrf.mxu0
  %v525 = vadd.f32 0.0, %v524
  %526 = vdwg.mxu0
  %v531 = vunpack.c.l.b16 %v467
  %v532 = vunpack.c.l.b16 %v468
  %v533 = vunpack.c.l.b16 %v469
  %v534 = vunpack.c.l.b16 %v470
  %v535 = vpack.c.b16 %v532, %v531
  %v536 = vpack.c.b16 %v534, %v533
  %539 = vmatpush.bf16.msra.mxu0 0
  %540 = vmatpush.bf16.msra.mxu0 0
  %541 = vmatpush.bf16.msra.mxu0 0
  %542 = vmatpush.bf16.msra.mxu0 0
  %543 = vmatpush.bf16.msra.mxu0 0
  %544 = vmatpush.bf16.msra.mxu0 0
  %545 = vmatpush.bf16.msra.mxu0 %v536
  %546 = vmatpush.bf16.msra.mxu0 %v535
  %547 = vmatmul.bf16.gmra.mxu0 %v365
  %v548 = vpop.f32.mrf.mxu0
  %v549 = vadd.f32 0.0, %v548
  %v550 = vpop.f32.mrf.mxu0
  %v551 = vadd.f32 0.0, %v550
  %552 = vdwg.mxu0
  %v557 = vunpack.c.l.b16 %v471
  %v558 = vunpack.c.l.b16 %v472
  %v559 = vunpack.c.l.b16 %v473
  %v560 = vunpack.c.l.b16 %v474
  %v561 = vpack.c.b16 %v558, %v557
  %v562 = vpack.c.b16 %v560, %v559
  %565 = vmatpush.bf16.msra.mxu0 0
  %566 = vmatpush.bf16.msra.mxu0 0
  %567 = vmatpush.bf16.msra.mxu0 0
  %568 = vmatpush.bf16.msra.mxu0 0
  %569 = vmatpush.bf16.msra.mxu0 0
  %570 = vmatpush.bf16.msra.mxu0 0
  %571 = vmatpush.bf16.msra.mxu0 %v562
  %572 = vmatpush.bf16.msra.mxu0 %v561
  %573 = vmatmul.bf16.gmra.mxu0 %v365
  %v574 = vpop.f32.mrf.mxu0
  %v575 = vadd.f32 0.0, %v574
  %v576 = vpop.f32.mrf.mxu0
  %v577 = vadd.f32 0.0, %v576
  %578 = vdwg.mxu0
  %v579 = vld [vmem:[%s7] sm:$0xf]
  %v580 = vld [vmem:[%s7 + $0x4] sm:$0xf]
  %v581 = vld [vmem:[%s7 + $0x8] sm:$0xf]
  %v582 = vld [vmem:[%s7 + $0xc] sm:$0xf]
  %v583 = vld [vmem:[%s7 + $0x10] sm:$0xf]
  %v584 = vld [vmem:[%s7 + $0x14] sm:$0xf]
  %v585 = vld [vmem:[%s7 + $0x18] sm:$0xf]
  %v586 = vld [vmem:[%s7 + $0x1c] sm:$0xf]
  %v587 = vld [vmem:[%s7 + $0x20] sm:$0xf]
  %v588 = vld [vmem:[%s7 + $0x24] sm:$0xf]
  %v589 = vld [vmem:[%s7 + $0x28] sm:$0xf]
  %v590 = vld [vmem:[%s7 + $0x2c] sm:$0xf]
  %v591 = vld [vmem:[%s7 + $0x30] sm:$0xf]
  %v592 = vld [vmem:[%s7 + $0x34] sm:$0xf]
  %v593 = vld [vmem:[%s7 + $0x38] sm:$0xf]
  %v594 = vld [vmem:[%s7 + $0x3c] sm:$0xf]
  %v599 = vunpack.c.l.b16 %v579
  %v600 = vunpack.c.l.b16 %v580
  %v601 = vunpack.c.l.b16 %v581
  %v602 = vunpack.c.l.b16 %v582
  %v603 = vpack.c.b16 %v600, %v599
  %v604 = vpack.c.b16 %v602, %v601
  %607 = vmatpush.bf16.msra.mxu0 0
  %608 = vmatpush.bf16.msra.mxu0 0
  %609 = vmatpush.bf16.msra.mxu0 0
  %610 = vmatpush.bf16.msra.mxu0 0
  %611 = vmatpush.bf16.msra.mxu0 0
  %612 = vmatpush.bf16.msra.mxu0 0
  %613 = vmatpush.bf16.msra.mxu0 %v604
  %614 = vmatpush.bf16.msra.mxu0 %v603
  %615 = vmatmul.bf16.gmra.mxu0 %v365
  %v616 = vpop.f32.mrf.mxu0
  %v617 = vadd.f32 0.0, %v616
  %v618 = vpop.f32.mrf.mxu0
  %v619 = vadd.f32 0.0, %v618
  %620 = vdwg.mxu0
  %v625 = vunpack.c.l.b16 %v583
  %v626 = vunpack.c.l.b16 %v584
  %v627 = vunpack.c.l.b16 %v585
  %v628 = vunpack.c.l.b16 %v586
  %v629 = vpack.c.b16 %v626, %v625
  %v630 = vpack.c.b16 %v628, %v627
  %633 = vmatpush.bf16.msra.mxu0 0
  %634 = vmatpush.bf16.msra.mxu0 0
  %635 = vmatpush.bf16.msra.mxu0 0
  %636 = vmatpush.bf16.msra.mxu0 0
  %637 = vmatpush.bf16.msra.mxu0 0
  %638 = vmatpush.bf16.msra.mxu0 0
  %639 = vmatpush.bf16.msra.mxu0 %v630
  %640 = vmatpush.bf16.msra.mxu0 %v629
  %641 = vmatmul.bf16.gmra.mxu0 %v365
  %v642 = vpop.f32.mrf.mxu0
  %v643 = vadd.f32 0.0, %v642
  %v644 = vpop.f32.mrf.mxu0
  %v645 = vadd.f32 0.0, %v644
  %646 = vdwg.mxu0
  %v651 = vunpack.c.l.b16 %v587
  %v652 = vunpack.c.l.b16 %v588
  %v653 = vunpack.c.l.b16 %v589
  %v654 = vunpack.c.l.b16 %v590
  %v655 = vpack.c.b16 %v652, %v651
  %v656 = vpack.c.b16 %v654, %v653
  %659 = vmatpush.bf16.msra.mxu0 0
  %660 = vmatpush.bf16.msra.mxu0 0
  %661 = vmatpush.bf16.msra.mxu0 0
  %662 = vmatpush.bf16.msra.mxu0 0
  %663 = vmatpush.bf16.msra.mxu0 0
  %664 = vmatpush.bf16.msra.mxu0 0
  %665 = vmatpush.bf16.msra.mxu0 %v656
  %666 = vmatpush.bf16.msra.mxu0 %v655
  %667 = vmatmul.bf16.gmra.mxu0 %v365
  %v668 = vpop.f32.mrf.mxu0
  %v669 = vadd.f32 0.0, %v668
  %v670 = vpop.f32.mrf.mxu0
  %v671 = vadd.f32 0.0, %v670
  %672 = vdwg.mxu0
  %v677 = vunpack.c.l.b16 %v591
  %v678 = vunpack.c.l.b16 %v592
  %v679 = vunpack.c.l.b16 %v593
  %v680 = vunpack.c.l.b16 %v594
  %v681 = vpack.c.b16 %v678, %v677
  %v682 = vpack.c.b16 %v680, %v679
  %685 = vmatpush.bf16.msra.mxu0 0
  %686 = vmatpush.bf16.msra.mxu0 0
  %687 = vmatpush.bf16.msra.mxu0 0
  %688 = vmatpush.bf16.msra.mxu0 0
  %689 = vmatpush.bf16.msra.mxu0 0
  %690 = vmatpush.bf16.msra.mxu0 0
  %691 = vmatpush.bf16.msra.mxu0 %v682
  %692 = vmatpush.bf16.msra.mxu0 %v681
  %693 = vmatmul.bf16.gmra.mxu0 %v365
  %v694 = vpop.f32.mrf.mxu0
  %v695 = vadd.f32 0.0, %v694
  %v696 = vpop.f32.mrf.mxu0
  %v697 = vadd.f32 0.0, %v696
  %698 = vdwg.mxu0
  %v699 = vpack.c.bf16 %v377, %v377
  %v700 = vpack.c.bf16 %v379, %v379
  %v701 = vpack.c.bf16 %v403, %v403
  %v702 = vpack.c.bf16 %v405, %v405
  %v703 = vpack.c.bf16 %v429, %v429
  %v704 = vpack.c.bf16 %v431, %v431
  %v705 = vpack.c.bf16 %v455, %v455
  %v706 = vpack.c.bf16 %v457, %v457
  %v707 = vpack.c.bf16 %v497, %v497
  %v708 = vpack.c.bf16 %v499, %v499
  %v709 = vpack.c.bf16 %v523, %v523
  %v710 = vpack.c.bf16 %v525, %v525
  %v711 = vpack.c.bf16 %v549, %v549
  %v712 = vpack.c.bf16 %v551, %v551
  %v713 = vpack.c.bf16 %v575, %v575
  %v714 = vpack.c.bf16 %v577, %v577
  %v717 = vunpack.c.l.b16 %v699
  %v718 = vunpack.c.l.b16 %v700
  %v719 = vpack.c.b16 %v718, %v717
  %v722 = vunpack.c.l.b16 %v707
  %v723 = vunpack.c.l.b16 %v708
  %v724 = vpack.c.b16 %v723, %v722
  %vm725 = vcmask 64512
  %v727 = vsel %vm725, %v719, 0
  %v730 = vsel %vm725, %v724, 0
  %732 = vmatpush.bf16.xpose.msra.mxu0 0
  %733 = vmatpush.bf16.xpose.msra.mxu0 0
  %734 = vmatpush.bf16.xpose.msra.mxu0 0
  %735 = vmatpush.bf16.xpose.msra.mxu0 0
  %736 = vmatpush.bf16.xpose.msra.mxu0 0
  %737 = vmatpush.bf16.xpose.msra.mxu0 0
  %738 = vmatpush.bf16.xpose.msra.mxu0 0
  %739 = vmatpush.bf16.xpose.msra.mxu0 %v730
  %740 = vmatmul.bf16.gmra.mxu0 %v727
  %v741 = vpop.f32.mrf.mxu0
  %v742 = vadd.f32 0.0, %v741
  %v743 = vpop.f32.mrf.mxu0
  %v744 = vadd.f32 0.0, %v743
  %745 = vdwg.mxu0
  %v748 = vunpack.c.l.b16 %v701
  %v749 = vunpack.c.l.b16 %v702
  %v750 = vpack.c.b16 %v749, %v748
  %v753 = vunpack.c.l.b16 %v709
  %v754 = vunpack.c.l.b16 %v710
  %v755 = vpack.c.b16 %v754, %v753
  %v757 = vsel %vm725, %v750, 0
  %v760 = vsel %vm725, %v755, 0
  %762 = vmatpush.bf16.xpose.msra.mxu0 0
  %763 = vmatpush.bf16.xpose.msra.mxu0 0
  %764 = vmatpush.bf16.xpose.msra.mxu0 0
  %765 = vmatpush.bf16.xpose.msra.mxu0 0
  %766 = vmatpush.bf16.xpose.msra.mxu0 0
  %767 = vmatpush.bf16.xpose.msra.mxu0 0
  %768 = vmatpush.bf16.xpose.msra.mxu0 0
  %769 = vmatpush.bf16.xpose.msra.mxu0 %v760
  %770 = vmatmul.bf16.gmra.mxu0 %v757
  %v771 = vpop.f32.mrf.mxu0
  %v772 = vadd.f32 0.0, %v771
  %v773 = vpop.f32.mrf.mxu0
  %v774 = vadd.f32 0.0, %v773
  %775 = vdwg.mxu0
  %v778 = vunpack.c.l.b16 %v703
  %v779 = vunpack.c.l.b16 %v704
  %v780 = vpack.c.b16 %v779, %v778
  %v783 = vunpack.c.l.b16 %v711
  %v784 = vunpack.c.l.b16 %v712
  %v785 = vpack.c.b16 %v784, %v783
  %v787 = vsel %vm725, %v780, 0
  %v790 = vsel %vm725, %v785, 0
  %792 = vmatpush.bf16.xpose.msra.mxu0 0
  %793 = vmatpush.bf16.xpose.msra.mxu0 0
  %794 = vmatpush.bf16.xpose.msra.mxu0 0
  %795 = vmatpush.bf16.xpose.msra.mxu0 0
  %796 = vmatpush.bf16.xpose.msra.mxu0 0
  %797 = vmatpush.bf16.xpose.msra.mxu0 0
  %798 = vmatpush.bf16.xpose.msra.mxu0 0
  %799 = vmatpush.bf16.xpose.msra.mxu0 %v790
  %800 = vmatmul.bf16.gmra.mxu0 %v787
  %v801 = vpop.f32.mrf.mxu0
  %v802 = vadd.f32 0.0, %v801
  %v803 = vpop.f32.mrf.mxu0
  %v804 = vadd.f32 0.0, %v803
  %805 = vdwg.mxu0
  %v808 = vunpack.c.l.b16 %v705
  %v809 = vunpack.c.l.b16 %v706
  %v810 = vpack.c.b16 %v809, %v808
  %v813 = vunpack.c.l.b16 %v713
  %v814 = vunpack.c.l.b16 %v714
  %v815 = vpack.c.b16 %v814, %v813
  %v817 = vsel %vm725, %v810, 0
  %v820 = vsel %vm725, %v815, 0
  %822 = vmatpush.bf16.xpose.msra.mxu0 0
  %823 = vmatpush.bf16.xpose.msra.mxu0 0
  %824 = vmatpush.bf16.xpose.msra.mxu0 0
  %825 = vmatpush.bf16.xpose.msra.mxu0 0
  %826 = vmatpush.bf16.xpose.msra.mxu0 0
  %827 = vmatpush.bf16.xpose.msra.mxu0 0
  %828 = vmatpush.bf16.xpose.msra.mxu0 0
  %829 = vmatpush.bf16.xpose.msra.mxu0 %v820
  %830 = vmatmul.bf16.gmra.mxu0 %v817
  %v831 = vpop.f32.mrf.mxu0
  %v832 = vadd.f32 0.0, %v831
  %v833 = vpop.f32.mrf.mxu0
  %v834 = vadd.f32 0.0, %v833
  %835 = vdwg.mxu0
  %v836 = vsel %vm211, %v742, -inf
  %837 = vmax.xlane.f32.xlu0 %v836
  %v838 = vpop.xlane.xlu0 %837
  %v839 = vsel %vm211, %v744, -inf
  %840 = vmax.xlane.f32.xlu0 %v839
  %v841 = vpop.xlane.xlu0 %840
  %v842 = vsel %vm211, %v772, -inf
  %843 = vmax.xlane.f32.xlu0 %v842
  %v844 = vpop.xlane.xlu0 %843
  %v845 = vsel %vm211, %v774, -inf
  %846 = vmax.xlane.f32.xlu0 %v845
  %v847 = vpop.xlane.xlu0 %846
  %v848 = vsel %vm211, %v802, -inf
  %849 = vmax.xlane.f32.xlu0 %v848
  %v850 = vpop.xlane.xlu0 %849
  %v851 = vsel %vm211, %v804, -inf
  %852 = vmax.xlane.f32.xlu0 %v851
  %v853 = vpop.xlane.xlu0 %852
  %v854 = vsel %vm211, %v832, -inf
  %855 = vmax.xlane.f32.xlu0 %v854
  %v856 = vpop.xlane.xlu0 %855
  %v857 = vsel %vm211, %v834, -inf
  %858 = vmax.xlane.f32.xlu0 %v857
  %v859 = vpop.xlane.xlu0 %858
  %v860 = vsub.f32 %v742, %v838
  %v861 = vsub.f32 %v744, %v841
  %v862 = vsub.f32 %v772, %v844
  %v863 = vsub.f32 %v774, %v847
  %v864 = vsub.f32 %v802, %v850
  %v865 = vsub.f32 %v804, %v853
  %v866 = vsub.f32 %v832, %v856
  %v867 = vsub.f32 %v834, %v859
  %v868 = vmul.f32 %v860, 1.442695
  %v869 = vpow.pop %v868
  %v870 = vmul.f32 %v861, 1.442695
  %v871 = vpow.pop %v870
  %v872 = vmul.f32 %v862, 1.442695
  %v873 = vpow.pop %v872
  %v874 = vmul.f32 %v863, 1.442695
  %v875 = vpow.pop %v874
  %v876 = vmul.f32 %v864, 1.442695
  %v877 = vpow.pop %v876
  %v878 = vmul.f32 %v865, 1.442695
  %v879 = vpow.pop %v878
  %v880 = vmul.f32 %v866, 1.442695
  %v881 = vpow.pop %v880
  %v882 = vmul.f32 %v867, 1.442695
  %v883 = vpow.pop %v882
  %v884 = vsel %vm211, %v869, 0.0
  %885 = vadd.xlane.f32.xlu0 %v884
  %v886 = vpop.xlane.xlu0 %885
  %v887 = vsel %vm211, %v871, 0.0
  %888 = vadd.xlane.f32.xlu0 %v887
  %v889 = vpop.xlane.xlu0 %888
  %v890 = vsel %vm211, %v873, 0.0
  %891 = vadd.xlane.f32.xlu0 %v890
  %v892 = vpop.xlane.xlu0 %891
  %v893 = vsel %vm211, %v875, 0.0
  %894 = vadd.xlane.f32.xlu0 %v893
  %v895 = vpop.xlane.xlu0 %894
  %v896 = vsel %vm211, %v877, 0.0
  %897 = vadd.xlane.f32.xlu0 %v896
  %v898 = vpop.xlane.xlu0 %897
  %v899 = vsel %vm211, %v879, 0.0
  %900 = vadd.xlane.f32.xlu0 %v899
  %v901 = vpop.xlane.xlu0 %900
  %v902 = vsel %vm211, %v881, 0.0
  %903 = vadd.xlane.f32.xlu0 %v902
  %v904 = vpop.xlane.xlu0 %903
  %v905 = vsel %vm211, %v883, 0.0
  %906 = vadd.xlane.f32.xlu0 %v905
  %v907 = vpop.xlane.xlu0 %906
  %v908 = vrcp.pop %v886
  %v909 = vrcp.pop %v889
  %v910 = vrcp.pop %v892
  %v911 = vrcp.pop %v895
  %v912 = vrcp.pop %v898
  %v913 = vrcp.pop %v901
  %v914 = vrcp.pop %v904
  %v915 = vrcp.pop %v907
  %v916 = vmul.f32 %v869, %v908
  %v917 = vmul.f32 %v871, %v909
  %v918 = vmul.f32 %v873, %v910
  %v919 = vmul.f32 %v875, %v911
  %v920 = vmul.f32 %v877, %v912
  %v921 = vmul.f32 %v879, %v913
  %v922 = vmul.f32 %v881, %v914
  %v923 = vmul.f32 %v883, %v915
  %v924 = vpack.c.bf16 %v916, %v916
  %v925 = vpack.c.bf16 %v917, %v917
  %v926 = vpack.c.bf16 %v918, %v918
  %v927 = vpack.c.bf16 %v919, %v919
  %v928 = vpack.c.bf16 %v920, %v920
  %v929 = vpack.c.bf16 %v921, %v921
  %v930 = vpack.c.bf16 %v922, %v922
  %v931 = vpack.c.bf16 %v923, %v923
  %v932 = vpack.c.bf16 %v617, %v617
  %v933 = vpack.c.bf16 %v619, %v619
  %v934 = vpack.c.bf16 %v643, %v643
  %v935 = vpack.c.bf16 %v645, %v645
  %v936 = vpack.c.bf16 %v669, %v669
  %v937 = vpack.c.bf16 %v671, %v671
  %v938 = vpack.c.bf16 %v695, %v695
  %v939 = vpack.c.bf16 %v697, %v697
  %v942 = vunpack.c.l.b16 %v924
  %v943 = vunpack.c.l.b16 %v925
  %v944 = vpack.c.b16 %v943, %v942
  %v947 = vunpack.c.l.b16 %v932
  %v948 = vunpack.c.l.b16 %v933
  %v949 = vpack.c.b16 %v948, %v947
  %v952 = vsel %vm211, %v944, 0
  %954 = vmatpush.bf16.msra.mxu0 0
  %955 = vmatpush.bf16.msra.mxu0 0
  %956 = vmatpush.bf16.msra.mxu0 0
  %957 = vmatpush.bf16.msra.mxu0 0
  %958 = vmatpush.bf16.msra.mxu0 0
  %959 = vmatpush.bf16.msra.mxu0 0
  %960 = vmatpush.bf16.msra.mxu0 0
  %961 = vmatpush.bf16.msra.mxu0 %v949
  %962 = vmatmul.bf16.gmra.mxu0 %v952
  %v963 = vpop.f32.mrf.mxu0
  %v964 = vadd.f32 0.0, %v963
  %v965 = vpop.f32.mrf.mxu0
  %v966 = vadd.f32 0.0, %v965
  %967 = vdwg.mxu0
  %v970 = vunpack.c.l.b16 %v926
  %v971 = vunpack.c.l.b16 %v927
  %v972 = vpack.c.b16 %v971, %v970
  %v975 = vunpack.c.l.b16 %v934
  %v976 = vunpack.c.l.b16 %v935
  %v977 = vpack.c.b16 %v976, %v975
  %v980 = vsel %vm211, %v972, 0
  %982 = vmatpush.bf16.msra.mxu0 0
  %983 = vmatpush.bf16.msra.mxu0 0
  %984 = vmatpush.bf16.msra.mxu0 0
  %985 = vmatpush.bf16.msra.mxu0 0
  %986 = vmatpush.bf16.msra.mxu0 0
  %987 = vmatpush.bf16.msra.mxu0 0
  %988 = vmatpush.bf16.msra.mxu0 0
  %989 = vmatpush.bf16.msra.mxu0 %v977
  %990 = vmatmul.bf16.gmra.mxu0 %v980
  %v991 = vpop.f32.mrf.mxu0
  %v992 = vadd.f32 0.0, %v991
  %v993 = vpop.f32.mrf.mxu0
  %v994 = vadd.f32 0.0, %v993
  %995 = vdwg.mxu0
  %v998 = vunpack.c.l.b16 %v928
  %v999 = vunpack.c.l.b16 %v929
  %v1000 = vpack.c.b16 %v999, %v998
  %v1003 = vunpack.c.l.b16 %v936
  %v1004 = vunpack.c.l.b16 %v937
  %v1005 = vpack.c.b16 %v1004, %v1003
  %v1008 = vsel %vm211, %v1000, 0
  %1010 = vmatpush.bf16.msra.mxu0 0
  %1011 = vmatpush.bf16.msra.mxu0 0
  %1012 = vmatpush.bf16.msra.mxu0 0
  %1013 = vmatpush.bf16.msra.mxu0 0
  %1014 = vmatpush.bf16.msra.mxu0 0
  %1015 = vmatpush.bf16.msra.mxu0 0
  %1016 = vmatpush.bf16.msra.mxu0 0
  %1017 = vmatpush.bf16.msra.mxu0 %v1005
  %1018 = vmatmul.bf16.gmra.mxu0 %v1008
  %v1019 = vpop.f32.mrf.mxu0
  %v1020 = vadd.f32 0.0, %v1019
  %v1021 = vpop.f32.mrf.mxu0
  %v1022 = vadd.f32 0.0, %v1021
  %1023 = vdwg.mxu0
  %v1026 = vunpack.c.l.b16 %v930
  %v1027 = vunpack.c.l.b16 %v931
  %v1028 = vpack.c.b16 %v1027, %v1026
  %v1031 = vunpack.c.l.b16 %v938
  %v1032 = vunpack.c.l.b16 %v939
  %v1033 = vpack.c.b16 %v1032, %v1031
  %v1036 = vsel %vm211, %v1028, 0
  %1038 = vmatpush.bf16.msra.mxu0 0
  %1039 = vmatpush.bf16.msra.mxu0 0
  %1040 = vmatpush.bf16.msra.mxu0 0
  %1041 = vmatpush.bf16.msra.mxu0 0
  %1042 = vmatpush.bf16.msra.mxu0 0
  %1043 = vmatpush.bf16.msra.mxu0 0
  %1044 = vmatpush.bf16.msra.mxu0 0
  %1045 = vmatpush.bf16.msra.mxu0 %v1033
  %1046 = vmatmul.bf16.gmra.mxu0 %v1036
  %v1047 = vpop.f32.mrf.mxu0
  %v1048 = vadd.f32 0.0, %v1047
  %v1049 = vpop.f32.mrf.mxu0
  %v1050 = vadd.f32 0.0, %v1049
  %1051 = vdwg.mxu0
  %v1052 = vpack.c.bf16 %v964, %v964
  %v1053 = vpack.c.bf16 %v966, %v966
  %v1054 = vpack.c.bf16 %v992, %v992
  %v1055 = vpack.c.bf16 %v994, %v994
  %v1056 = vpack.c.bf16 %v1020, %v1020
  %v1057 = vpack.c.bf16 %v1022, %v1022
  %v1058 = vpack.c.bf16 %v1048, %v1048
  %v1059 = vpack.c.bf16 %v1050, %v1050
  %v1060 = vld [vmem:[%s9] sm:$0xf]
  %v1061 = vld [vmem:[%s9 + $0x4] sm:$0xf]
  %v1062 = vld [vmem:[%s9 + $0x8] sm:$0xf]
  %v1063 = vld [vmem:[%s9 + $0xc] sm:$0xf]
  %v1066 = vunpack.c.l.b16 %v1052
  %v1067 = vunpack.c.l.b16 %v1053
  %v1068 = vpack.c.b16 %v1067, %v1066
  %v1070 = vsel %vm725, %v1068, 0
  %vm1072 = vcmask 1043456
  %v1074 = vsel %vm1072, %v1060, 0
  %1076 = vmatpush.bf16.msra.mxu0 0
  %1077 = vmatpush.bf16.msra.mxu0 0
  %1078 = vmatpush.bf16.msra.mxu0 0
  %1079 = vmatpush.bf16.msra.mxu0 0
  %1080 = vmatpush.bf16.msra.mxu0 0
  %1081 = vmatpush.bf16.msra.mxu0 0
  %1082 = vmatpush.bf16.msra.mxu0 0
  %1083 = vmatpush.bf16.msra.mxu0 %v1074
  %1084 = vmatmul.bf16.gmra.mxu0 %v1070
  %v1085 = vpop.f32.mrf.mxu0
  %v1086 = vadd.f32 0.0, %v1085
  %v1087 = vpop.f32.mrf.mxu0
  %v1088 = vadd.f32 0.0, %v1087
  %1089 = vdwg.mxu0
  %v1092 = vunpack.c.l.b16 %v1054
  %v1093 = vunpack.c.l.b16 %v1055
  %v1094 = vpack.c.b16 %v1093, %v1092
  %v1096 = vsel %vm725, %v1094, 0
  %v1099 = vsel %vm1072, %v1061, 0
  %1101 = vmatpush.bf16.msra.mxu0 0
  %1102 = vmatpush.bf16.msra.mxu0 0
  %1103 = vmatpush.bf16.msra.mxu0 0
  %1104 = vmatpush.bf16.msra.mxu0 0
  %1105 = vmatpush.bf16.msra.mxu0 0
  %1106 = vmatpush.bf16.msra.mxu0 0
  %1107 = vmatpush.bf16.msra.mxu0 0
  %1108 = vmatpush.bf16.msra.mxu0 %v1099
  %1109 = vmatmul.bf16.gmra.mxu0 %v1096
  %v1110 = vpop.f32.mrf.mxu0
  %v1111 = vadd.f32 0.0, %v1110
  %v1112 = vpop.f32.mrf.mxu0
  %v1113 = vadd.f32 0.0, %v1112
  %1114 = vdwg.mxu0
  %v1117 = vunpack.c.l.b16 %v1056
  %v1118 = vunpack.c.l.b16 %v1057
  %v1119 = vpack.c.b16 %v1118, %v1117
  %v1121 = vsel %vm725, %v1119, 0
  %v1124 = vsel %vm1072, %v1062, 0
  %1126 = vmatpush.bf16.msra.mxu0 0
  %1127 = vmatpush.bf16.msra.mxu0 0
  %1128 = vmatpush.bf16.msra.mxu0 0
  %1129 = vmatpush.bf16.msra.mxu0 0
  %1130 = vmatpush.bf16.msra.mxu0 0
  %1131 = vmatpush.bf16.msra.mxu0 0
  %1132 = vmatpush.bf16.msra.mxu0 0
  %1133 = vmatpush.bf16.msra.mxu0 %v1124
  %1134 = vmatmul.bf16.gmra.mxu0 %v1121
  %v1135 = vpop.f32.mrf.mxu0
  %v1136 = vadd.f32 0.0, %v1135
  %v1137 = vpop.f32.mrf.mxu0
  %v1138 = vadd.f32 0.0, %v1137
  %1139 = vdwg.mxu0
  %v1142 = vunpack.c.l.b16 %v1058
  %v1143 = vunpack.c.l.b16 %v1059
  %v1144 = vpack.c.b16 %v1143, %v1142
  %v1146 = vsel %vm725, %v1144, 0
  %v1149 = vsel %vm1072, %v1063, 0
  %1151 = vmatpush.bf16.msra.mxu0 0
  %1152 = vmatpush.bf16.msra.mxu0 0
  %1153 = vmatpush.bf16.msra.mxu0 0
  %1154 = vmatpush.bf16.msra.mxu0 0
  %1155 = vmatpush.bf16.msra.mxu0 0
  %1156 = vmatpush.bf16.msra.mxu0 0
  %1157 = vmatpush.bf16.msra.mxu0 0
  %1158 = vmatpush.bf16.msra.mxu0 %v1149
  %1159 = vmatmul.bf16.gmra.mxu0 %v1146
  %v1160 = vpop.f32.mrf.mxu0
  %v1161 = vadd.f32 0.0, %v1160
  %v1162 = vpop.f32.mrf.mxu0
  %v1163 = vadd.f32 0.0, %v1162
  %1164 = vdwg.mxu0
  %v1165 = vadd.f32 %v1086, %v1111
  %v1166 = vadd.f32 %v1165, %v1136
  %v1167 = vadd.f32 %v1166, %v1161
  %v1168 = vadd.f32 %v1088, %v1113
  %v1169 = vadd.f32 %v1168, %v1138
  %v1170 = vadd.f32 %v1169, %v1163
  %v1171 = vld [vmem:[%s8] sm:$0xf]
  %v1172 = vld [vmem:[%s8 + $0x4] sm:$0xf]
  %v1173 = vld [vmem:[%s8 + $0x8] sm:$0xf]
  %v1174 = vld [vmem:[%s8 + $0xc] sm:$0xf]
  %v1175 = vld [vmem:[%s8 + $0x10] sm:$0xf]
  %v1176 = vld [vmem:[%s8 + $0x14] sm:$0xf]
  %v1177 = vld [vmem:[%s8 + $0x18] sm:$0xf]
  %v1178 = vld [vmem:[%s8 + $0x1c] sm:$0xf]
  %v1179 = vpack.c.bf16 %v309, %v309
  %v1180 = vpack.c.bf16 %v310, %v310
  %v1183 = vunpack.c.l.b16 %v1179
  %v1184 = vunpack.c.l.b16 %v1180
  %v1185 = vpack.c.b16 %v1184, %v1183
  %1186 = vrot.lane.b32.xlu0 %v1185, 96
  %v1187 = vpop.permute.xlu0 %1186
  %v1190 = vunpack.c.l.b16 %v1171
  %v1191 = vunpack.c.l.b16 %v1172
  %v1192 = vpack.c.b16 %v1191, %v1190
  %v1195 = vsel %vm211, %v1187, 0
  %1197 = vmatpush.bf16.msra.mxu0 0
  %1198 = vmatpush.bf16.msra.mxu0 0
  %1199 = vmatpush.bf16.msra.mxu0 0
  %1200 = vmatpush.bf16.msra.mxu0 0
  %1201 = vmatpush.bf16.msra.mxu0 0
  %1202 = vmatpush.bf16.msra.mxu0 0
  %1203 = vmatpush.bf16.msra.mxu0 0
  %1204 = vmatpush.bf16.msra.mxu0 %v1192
  %1205 = vmatmul.bf16.gmra.mxu0 %v1195
  %v1206 = vpop.f32.mrf.mxu0
  %v1207 = vadd.f32 0.0, %v1206
  %v1208 = vpop.f32.mrf.mxu0
  %v1209 = vadd.f32 0.0, %v1208
  %1210 = vdwg.mxu0
  %v1213 = vunpack.c.l.b16 %v1173
  %v1214 = vunpack.c.l.b16 %v1174
  %v1215 = vpack.c.b16 %v1214, %v1213
  %1217 = vmatpush.bf16.msra.mxu0 0
  %1218 = vmatpush.bf16.msra.mxu0 0
  %1219 = vmatpush.bf16.msra.mxu0 0
  %1220 = vmatpush.bf16.msra.mxu0 0
  %1221 = vmatpush.bf16.msra.mxu0 0
  %1222 = vmatpush.bf16.msra.mxu0 0
  %1223 = vmatpush.bf16.msra.mxu0 0
  %1224 = vmatpush.bf16.msra.mxu0 %v1215
  %1225 = vmatmul.bf16.gmra.mxu0 %v1195
  %v1226 = vpop.f32.mrf.mxu0
  %v1227 = vadd.f32 0.0, %v1226
  %v1228 = vpop.f32.mrf.mxu0
  %v1229 = vadd.f32 0.0, %v1228
  %1230 = vdwg.mxu0
  %v1233 = vunpack.c.l.b16 %v1175
  %v1234 = vunpack.c.l.b16 %v1176
  %v1235 = vpack.c.b16 %v1234, %v1233
  %1237 = vmatpush.bf16.msra.mxu0 0
  %1238 = vmatpush.bf16.msra.mxu0 0
  %1239 = vmatpush.bf16.msra.mxu0 0
  %1240 = vmatpush.bf16.msra.mxu0 0
  %1241 = vmatpush.bf16.msra.mxu0 0
  %1242 = vmatpush.bf16.msra.mxu0 0
  %1243 = vmatpush.bf16.msra.mxu0 0
  %1244 = vmatpush.bf16.msra.mxu0 %v1235
  %1245 = vmatmul.bf16.gmra.mxu0 %v1195
  %v1246 = vpop.f32.mrf.mxu0
  %v1247 = vadd.f32 0.0, %v1246
  %v1248 = vpop.f32.mrf.mxu0
  %v1249 = vadd.f32 0.0, %v1248
  %1250 = vdwg.mxu0
  %v1253 = vunpack.c.l.b16 %v1177
  %v1254 = vunpack.c.l.b16 %v1178
  %v1255 = vpack.c.b16 %v1254, %v1253
  %1257 = vmatpush.bf16.msra.mxu0 0
  %1258 = vmatpush.bf16.msra.mxu0 0
  %1259 = vmatpush.bf16.msra.mxu0 0
  %1260 = vmatpush.bf16.msra.mxu0 0
  %1261 = vmatpush.bf16.msra.mxu0 0
  %1262 = vmatpush.bf16.msra.mxu0 0
  %1263 = vmatpush.bf16.msra.mxu0 0
  %1264 = vmatpush.bf16.msra.mxu0 %v1255
  %1265 = vmatmul.bf16.gmra.mxu0 %v1195
  %v1266 = vpop.f32.mrf.mxu0
  %v1267 = vadd.f32 0.0, %v1266
  %v1268 = vpop.f32.mrf.mxu0
  %v1269 = vadd.f32 0.0, %v1268
  %1270 = vdwg.mxu0
  %v1271 = vpack.c.bf16 %v1207, %v1207
  %v1272 = vpack.c.bf16 %v1209, %v1209
  %v1273 = vpack.c.bf16 %v1227, %v1227
  %v1274 = vpack.c.bf16 %v1229, %v1229
  %v1275 = vpack.c.bf16 %v1247, %v1247
  %v1276 = vpack.c.bf16 %v1249, %v1249
  %v1277 = vpack.c.bf16 %v1267, %v1267
  %v1278 = vpack.c.bf16 %v1269, %v1269
  %v1281 = vunpack.c.l.b16 %v1271
  %v1282 = vunpack.c.l.b16 %v1272
  %v1283 = vpack.c.b16 %v1282, %v1281
  %1285 = vmatpush.bf16.msra.mxu0 0
  %1286 = vmatpush.bf16.msra.mxu0 0
  %1287 = vmatpush.bf16.msra.mxu0 0
  %1288 = vmatpush.bf16.msra.mxu0 0
  %1289 = vmatpush.bf16.msra.mxu0 0
  %1290 = vmatpush.bf16.msra.mxu0 0
  %1291 = vmatpush.bf16.msra.mxu0 0
  %1292 = vmatpush.bf16.msra.mxu0 %v1283
  %1293 = vmatmul.bf16.gmra.mxu0 %v952
  %v1294 = vpop.f32.mrf.mxu0
  %v1295 = vadd.f32 0.0, %v1294
  %v1296 = vpop.f32.mrf.mxu0
  %v1297 = vadd.f32 0.0, %v1296
  %1298 = vdwg.mxu0
  %v1301 = vunpack.c.l.b16 %v1273
  %v1302 = vunpack.c.l.b16 %v1274
  %v1303 = vpack.c.b16 %v1302, %v1301
  %1305 = vmatpush.bf16.msra.mxu0 0
  %1306 = vmatpush.bf16.msra.mxu0 0
  %1307 = vmatpush.bf16.msra.mxu0 0
  %1308 = vmatpush.bf16.msra.mxu0 0
  %1309 = vmatpush.bf16.msra.mxu0 0
  %1310 = vmatpush.bf16.msra.mxu0 0
  %1311 = vmatpush.bf16.msra.mxu0 0
  %1312 = vmatpush.bf16.msra.mxu0 %v1303
  %1313 = vmatmul.bf16.gmra.mxu0 %v980
  %v1314 = vpop.f32.mrf.mxu0
  %v1315 = vadd.f32 0.0, %v1314
  %v1316 = vpop.f32.mrf.mxu0
  %v1317 = vadd.f32 0.0, %v1316
  %1318 = vdwg.mxu0
  %v1321 = vunpack.c.l.b16 %v1275
  %v1322 = vunpack.c.l.b16 %v1276
  %v1323 = vpack.c.b16 %v1322, %v1321
  %1325 = vmatpush.bf16.msra.mxu0 0
  %1326 = vmatpush.bf16.msra.mxu0 0
  %1327 = vmatpush.bf16.msra.mxu0 0
  %1328 = vmatpush.bf16.msra.mxu0 0
  %1329 = vmatpush.bf16.msra.mxu0 0
  %1330 = vmatpush.bf16.msra.mxu0 0
  %1331 = vmatpush.bf16.msra.mxu0 0
  %1332 = vmatpush.bf16.msra.mxu0 %v1323
  %1333 = vmatmul.bf16.gmra.mxu0 %v1008
  %v1334 = vpop.f32.mrf.mxu0
  %v1335 = vadd.f32 0.0, %v1334
  %v1336 = vpop.f32.mrf.mxu0
  %v1337 = vadd.f32 0.0, %v1336
  %1338 = vdwg.mxu0
  %v1341 = vunpack.c.l.b16 %v1277
  %v1342 = vunpack.c.l.b16 %v1278
  %v1343 = vpack.c.b16 %v1342, %v1341
  %1345 = vmatpush.bf16.msra.mxu0 0
  %1346 = vmatpush.bf16.msra.mxu0 0
  %1347 = vmatpush.bf16.msra.mxu0 0
  %1348 = vmatpush.bf16.msra.mxu0 0
  %1349 = vmatpush.bf16.msra.mxu0 0
  %1350 = vmatpush.bf16.msra.mxu0 0
  %1351 = vmatpush.bf16.msra.mxu0 0
  %1352 = vmatpush.bf16.msra.mxu0 %v1343
  %1353 = vmatmul.bf16.gmra.mxu0 %v1036
  %v1354 = vpop.f32.mrf.mxu0
  %v1355 = vadd.f32 0.0, %v1354
  %v1356 = vpop.f32.mrf.mxu0
  %v1357 = vadd.f32 0.0, %v1356
  %1358 = vdwg.mxu0
  %v1359 = vpack.c.bf16 %v1295, %v1295
  %v1360 = vpack.c.bf16 %v1297, %v1297
  %v1361 = vpack.c.bf16 %v1315, %v1315
  %v1362 = vpack.c.bf16 %v1317, %v1317
  %v1363 = vpack.c.bf16 %v1335, %v1335
  %v1364 = vpack.c.bf16 %v1337, %v1337
  %v1365 = vpack.c.bf16 %v1355, %v1355
  %v1366 = vpack.c.bf16 %v1357, %v1357
  %v1367 = vld [vmem:[%s10] sm:$0x3]
  %v1368 = vld [vmem:[%s10 + $0x2] sm:$0x3]
  %v1369 = vld [vmem:[%s10 + $0x4] sm:$0x3]
  %v1370 = vld [vmem:[%s10 + $0x6] sm:$0x3]
  %v1373 = vunpack.c.l.b16 %v1359
  %v1374 = vunpack.c.l.b16 %v1360
  %v1375 = vpack.c.b16 %v1374, %v1373
  %vm1376 = vcmask 31744
  %v1378 = vsel %vm1376, %v1375, 0
  %vm1380 = vcmask 1041408
  %v1382 = vsel %vm1380, %v1367, 0
  %1384 = vmatpush.bf16.msra.mxu0 0
  %1385 = vmatpush.bf16.msra.mxu0 0
  %1386 = vmatpush.bf16.msra.mxu0 0
  %1387 = vmatpush.bf16.msra.mxu0 0
  %1388 = vmatpush.bf16.msra.mxu0 0
  %1389 = vmatpush.bf16.msra.mxu0 0
  %1390 = vmatpush.bf16.msra.mxu0 0
  %1391 = vmatpush.bf16.msra.mxu0 %v1382
  %1392 = vmatmul.bf16.gmra.mxu0 %v1378
  %v1393 = vpop.f32.mrf.mxu0
  %v1394 = vadd.f32 0.0, %v1393
  %v1395 = vpop.f32.mrf.mxu0
  %v1396 = vadd.f32 0.0, %v1395
  %1397 = vdwg.mxu0
  %v1400 = vunpack.c.l.b16 %v1361
  %v1401 = vunpack.c.l.b16 %v1362
  %v1402 = vpack.c.b16 %v1401, %v1400
  %v1404 = vsel %vm1376, %v1402, 0
  %v1407 = vsel %vm1380, %v1368, 0
  %1409 = vmatpush.bf16.msra.mxu0 0
  %1410 = vmatpush.bf16.msra.mxu0 0
  %1411 = vmatpush.bf16.msra.mxu0 0
  %1412 = vmatpush.bf16.msra.mxu0 0
  %1413 = vmatpush.bf16.msra.mxu0 0
  %1414 = vmatpush.bf16.msra.mxu0 0
  %1415 = vmatpush.bf16.msra.mxu0 0
  %1416 = vmatpush.bf16.msra.mxu0 %v1407
  %1417 = vmatmul.bf16.gmra.mxu0 %v1404
  %v1418 = vpop.f32.mrf.mxu0
  %v1419 = vadd.f32 0.0, %v1418
  %v1420 = vpop.f32.mrf.mxu0
  %v1421 = vadd.f32 0.0, %v1420
  %1422 = vdwg.mxu0
  %v1425 = vunpack.c.l.b16 %v1363
  %v1426 = vunpack.c.l.b16 %v1364
  %v1427 = vpack.c.b16 %v1426, %v1425
  %v1429 = vsel %vm1376, %v1427, 0
  %v1432 = vsel %vm1380, %v1369, 0
  %1434 = vmatpush.bf16.msra.mxu0 0
  %1435 = vmatpush.bf16.msra.mxu0 0
  %1436 = vmatpush.bf16.msra.mxu0 0
  %1437 = vmatpush.bf16.msra.mxu0 0
  %1438 = vmatpush.bf16.msra.mxu0 0
  %1439 = vmatpush.bf16.msra.mxu0 0
  %1440 = vmatpush.bf16.msra.mxu0 0
  %1441 = vmatpush.bf16.msra.mxu0 %v1432
  %1442 = vmatmul.bf16.gmra.mxu0 %v1429
  %v1443 = vpop.f32.mrf.mxu0
  %v1444 = vadd.f32 0.0, %v1443
  %v1445 = vpop.f32.mrf.mxu0
  %v1446 = vadd.f32 0.0, %v1445
  %1447 = vdwg.mxu0
  %v1450 = vunpack.c.l.b16 %v1365
  %v1451 = vunpack.c.l.b16 %v1366
  %v1452 = vpack.c.b16 %v1451, %v1450
  %v1454 = vsel %vm1376, %v1452, 0
  %v1457 = vsel %vm1380, %v1370, 0
  %1459 = vmatpush.bf16.msra.mxu0 0
  %1460 = vmatpush.bf16.msra.mxu0 0
  %1461 = vmatpush.bf16.msra.mxu0 0
  %1462 = vmatpush.bf16.msra.mxu0 0
  %1463 = vmatpush.bf16.msra.mxu0 0
  %1464 = vmatpush.bf16.msra.mxu0 0
  %1465 = vmatpush.bf16.msra.mxu0 0
  %1466 = vmatpush.bf16.msra.mxu0 %v1457
  %1467 = vmatmul.bf16.gmra.mxu0 %v1454
  %v1468 = vpop.f32.mrf.mxu0
  %v1469 = vadd.f32 0.0, %v1468
  %v1470 = vpop.f32.mrf.mxu0
  %v1471 = vadd.f32 0.0, %v1470
  %1472 = vdwg.mxu0
  %v1473 = vadd.f32 %v1394, %v1419
  %v1474 = vadd.f32 %v1473, %v1444
  %v1475 = vadd.f32 %v1474, %v1469
  %v1476 = vadd.f32 %v1396, %v1421
  %v1477 = vadd.f32 %v1476, %v1446
  %v1478 = vadd.f32 %v1477, %v1471
  %v1479 = vadd.f32 %v1167, %v1475
  %v1480 = vadd.f32 %v1170, %v1478
  %v1481 = vpack.c.bf16 %v319, %v319
  %v1482 = vpack.c.bf16 %v320, %v320
  %v1485 = vunpack.c.l.b16 %v1481
  %v1486 = vunpack.c.l.b16 %v1482
  %v1487 = vpack.c.b16 %v1486, %v1485
  %1488 = vrot.lane.b32.xlu0 %v1487, 80
  %v1489 = vpop.permute.xlu0 %1488
  %v1491 = vsel %vm211, %v1489, 0
  %1493 = vmatpush.bf16.msra.mxu0 0
  %1494 = vmatpush.bf16.msra.mxu0 0
  %1495 = vmatpush.bf16.msra.mxu0 0
  %1496 = vmatpush.bf16.msra.mxu0 0
  %1497 = vmatpush.bf16.msra.mxu0 0
  %1498 = vmatpush.bf16.msra.mxu0 0
  %1499 = vmatpush.bf16.msra.mxu0 0
  %1500 = vmatpush.bf16.msra.mxu0 %v1192
  %1501 = vmatmul.bf16.gmra.mxu0 %v1491
  %v1502 = vpop.f32.mrf.mxu0
  %v1503 = vadd.f32 0.0, %v1502
  %v1504 = vpop.f32.mrf.mxu0
  %v1505 = vadd.f32 0.0, %v1504
  %1506 = vdwg.mxu0
  %1507 = vmatpush.bf16.msra.mxu0 0
  %1508 = vmatpush.bf16.msra.mxu0 0
  %1509 = vmatpush.bf16.msra.mxu0 0
  %1510 = vmatpush.bf16.msra.mxu0 0
  %1511 = vmatpush.bf16.msra.mxu0 0
  %1512 = vmatpush.bf16.msra.mxu0 0
  %1513 = vmatpush.bf16.msra.mxu0 0
  %1514 = vmatpush.bf16.msra.mxu0 %v1215
  %1515 = vmatmul.bf16.gmra.mxu0 %v1491
  %v1516 = vpop.f32.mrf.mxu0
  %v1517 = vadd.f32 0.0, %v1516
  %v1518 = vpop.f32.mrf.mxu0
  %v1519 = vadd.f32 0.0, %v1518
  %1520 = vdwg.mxu0
  %1521 = vmatpush.bf16.msra.mxu0 0
  %1522 = vmatpush.bf16.msra.mxu0 0
  %1523 = vmatpush.bf16.msra.mxu0 0
  %1524 = vmatpush.bf16.msra.mxu0 0
  %1525 = vmatpush.bf16.msra.mxu0 0
  %1526 = vmatpush.bf16.msra.mxu0 0
  %1527 = vmatpush.bf16.msra.mxu0 0
  %1528 = vmatpush.bf16.msra.mxu0 %v1235
  %1529 = vmatmul.bf16.gmra.mxu0 %v1491
  %v1530 = vpop.f32.mrf.mxu0
  %v1531 = vadd.f32 0.0, %v1530
  %v1532 = vpop.f32.mrf.mxu0
  %v1533 = vadd.f32 0.0, %v1532
  %1534 = vdwg.mxu0
  %1535 = vmatpush.bf16.msra.mxu0 0
  %1536 = vmatpush.bf16.msra.mxu0 0
  %1537 = vmatpush.bf16.msra.mxu0 0
  %1538 = vmatpush.bf16.msra.mxu0 0
  %1539 = vmatpush.bf16.msra.mxu0 0
  %1540 = vmatpush.bf16.msra.mxu0 0
  %1541 = vmatpush.bf16.msra.mxu0 0
  %1542 = vmatpush.bf16.msra.mxu0 %v1255
  %1543 = vmatmul.bf16.gmra.mxu0 %v1491
  %v1544 = vpop.f32.mrf.mxu0
  %v1545 = vadd.f32 0.0, %v1544
  %v1546 = vpop.f32.mrf.mxu0
  %v1547 = vadd.f32 0.0, %v1546
  %1548 = vdwg.mxu0
  %v1549 = vpack.c.bf16 %v1503, %v1503
  %v1550 = vpack.c.bf16 %v1505, %v1505
  %v1551 = vpack.c.bf16 %v1517, %v1517
  %v1552 = vpack.c.bf16 %v1519, %v1519
  %v1553 = vpack.c.bf16 %v1531, %v1531
  %v1554 = vpack.c.bf16 %v1533, %v1533
  %v1555 = vpack.c.bf16 %v1545, %v1545
  %v1556 = vpack.c.bf16 %v1547, %v1547
  %v1559 = vunpack.c.l.b16 %v1549
  %v1560 = vunpack.c.l.b16 %v1550
  %v1561 = vpack.c.b16 %v1560, %v1559
  %1563 = vmatpush.bf16.msra.mxu0 0
  %1564 = vmatpush.bf16.msra.mxu0 0
  %1565 = vmatpush.bf16.msra.mxu0 0
  %1566 = vmatpush.bf16.msra.mxu0 0
  %1567 = vmatpush.bf16.msra.mxu0 0
  %1568 = vmatpush.bf16.msra.mxu0 0
  %1569 = vmatpush.bf16.msra.mxu0 0
  %1570 = vmatpush.bf16.msra.mxu0 %v1561
  %1571 = vmatmul.bf16.gmra.mxu0 %v952
  %v1572 = vpop.f32.mrf.mxu0
  %v1573 = vadd.f32 0.0, %v1572
  %v1574 = vpop.f32.mrf.mxu0
  %v1575 = vadd.f32 0.0, %v1574
  %1576 = vdwg.mxu0
  %v1579 = vunpack.c.l.b16 %v1551
  %v1580 = vunpack.c.l.b16 %v1552
  %v1581 = vpack.c.b16 %v1580, %v1579
  %1583 = vmatpush.bf16.msra.mxu0 0
  %1584 = vmatpush.bf16.msra.mxu0 0
  %1585 = vmatpush.bf16.msra.mxu0 0
  %1586 = vmatpush.bf16.msra.mxu0 0
  %1587 = vmatpush.bf16.msra.mxu0 0
  %1588 = vmatpush.bf16.msra.mxu0 0
  %1589 = vmatpush.bf16.msra.mxu0 0
  %1590 = vmatpush.bf16.msra.mxu0 %v1581
  %1591 = vmatmul.bf16.gmra.mxu0 %v980
  %v1592 = vpop.f32.mrf.mxu0
  %v1593 = vadd.f32 0.0, %v1592
  %v1594 = vpop.f32.mrf.mxu0
  %v1595 = vadd.f32 0.0, %v1594
  %1596 = vdwg.mxu0
  %v1599 = vunpack.c.l.b16 %v1553
  %v1600 = vunpack.c.l.b16 %v1554
  %v1601 = vpack.c.b16 %v1600, %v1599
  %1603 = vmatpush.bf16.msra.mxu0 0
  %1604 = vmatpush.bf16.msra.mxu0 0
  %1605 = vmatpush.bf16.msra.mxu0 0
  %1606 = vmatpush.bf16.msra.mxu0 0
  %1607 = vmatpush.bf16.msra.mxu0 0
  %1608 = vmatpush.bf16.msra.mxu0 0
  %1609 = vmatpush.bf16.msra.mxu0 0
  %1610 = vmatpush.bf16.msra.mxu0 %v1601
  %1611 = vmatmul.bf16.gmra.mxu0 %v1008
  %v1612 = vpop.f32.mrf.mxu0
  %v1613 = vadd.f32 0.0, %v1612
  %v1614 = vpop.f32.mrf.mxu0
  %v1615 = vadd.f32 0.0, %v1614
  %1616 = vdwg.mxu0
  %v1619 = vunpack.c.l.b16 %v1555
  %v1620 = vunpack.c.l.b16 %v1556
  %v1621 = vpack.c.b16 %v1620, %v1619
  %1623 = vmatpush.bf16.msra.mxu0 0
  %1624 = vmatpush.bf16.msra.mxu0 0
  %1625 = vmatpush.bf16.msra.mxu0 0
  %1626 = vmatpush.bf16.msra.mxu0 0
  %1627 = vmatpush.bf16.msra.mxu0 0
  %1628 = vmatpush.bf16.msra.mxu0 0
  %1629 = vmatpush.bf16.msra.mxu0 0
  %1630 = vmatpush.bf16.msra.mxu0 %v1621
  %1631 = vmatmul.bf16.gmra.mxu0 %v1036
  %v1632 = vpop.f32.mrf.mxu0
  %v1633 = vadd.f32 0.0, %v1632
  %v1634 = vpop.f32.mrf.mxu0
  %v1635 = vadd.f32 0.0, %v1634
  %1636 = vdwg.mxu0
  %v1637 = vpack.c.bf16 %v1573, %v1573
  %v1638 = vpack.c.bf16 %v1575, %v1575
  %v1639 = vpack.c.bf16 %v1593, %v1593
  %v1640 = vpack.c.bf16 %v1595, %v1595
  %v1641 = vpack.c.bf16 %v1613, %v1613
  %v1642 = vpack.c.bf16 %v1615, %v1615
  %v1643 = vpack.c.bf16 %v1633, %v1633
  %v1644 = vpack.c.bf16 %v1635, %v1635
  %s1645 = scalar_lea.vmem %s10, 8
  %v1646 = vld [vmem:[%s1645] sm:$0x3]
  %v1647 = vld [vmem:[%s1645 + $0x2] sm:$0x3]
  %v1648 = vld [vmem:[%s1645 + $0x4] sm:$0x3]
  %v1649 = vld [vmem:[%s1645 + $0x6] sm:$0x3]
  %v1652 = vunpack.c.l.b16 %v1637
  %v1653 = vunpack.c.l.b16 %v1638
  %v1654 = vpack.c.b16 %v1653, %v1652
  %v1656 = vsel %vm1376, %v1654, 0
  %v1659 = vsel %vm1380, %v1646, 0
  %1661 = vmatpush.bf16.msra.mxu0 0
  %1662 = vmatpush.bf16.msra.mxu0 0
  %1663 = vmatpush.bf16.msra.mxu0 0
  %1664 = vmatpush.bf16.msra.mxu0 0
  %1665 = vmatpush.bf16.msra.mxu0 0
  %1666 = vmatpush.bf16.msra.mxu0 0
  %1667 = vmatpush.bf16.msra.mxu0 0
  %1668 = vmatpush.bf16.msra.mxu0 %v1659
  %1669 = vmatmul.bf16.gmra.mxu0 %v1656
  %v1670 = vpop.f32.mrf.mxu0
  %v1671 = vadd.f32 0.0, %v1670
  %v1672 = vpop.f32.mrf.mxu0
  %v1673 = vadd.f32 0.0, %v1672
  %1674 = vdwg.mxu0
  %v1677 = vunpack.c.l.b16 %v1639
  %v1678 = vunpack.c.l.b16 %v1640
  %v1679 = vpack.c.b16 %v1678, %v1677
  %v1681 = vsel %vm1376, %v1679, 0
  %v1684 = vsel %vm1380, %v1647, 0
  %1686 = vmatpush.bf16.msra.mxu0 0
  %1687 = vmatpush.bf16.msra.mxu0 0
  %1688 = vmatpush.bf16.msra.mxu0 0
  %1689 = vmatpush.bf16.msra.mxu0 0
  %1690 = vmatpush.bf16.msra.mxu0 0
  %1691 = vmatpush.bf16.msra.mxu0 0
  %1692 = vmatpush.bf16.msra.mxu0 0
  %1693 = vmatpush.bf16.msra.mxu0 %v1684
  %1694 = vmatmul.bf16.gmra.mxu0 %v1681
  %v1695 = vpop.f32.mrf.mxu0
  %v1696 = vadd.f32 0.0, %v1695
  %v1697 = vpop.f32.mrf.mxu0
  %v1698 = vadd.f32 0.0, %v1697
  %1699 = vdwg.mxu0
  %v1702 = vunpack.c.l.b16 %v1641
  %v1703 = vunpack.c.l.b16 %v1642
  %v1704 = vpack.c.b16 %v1703, %v1702
  %v1706 = vsel %vm1376, %v1704, 0
  %v1709 = vsel %vm1380, %v1648, 0
  %1711 = vmatpush.bf16.msra.mxu0 0
  %1712 = vmatpush.bf16.msra.mxu0 0
  %1713 = vmatpush.bf16.msra.mxu0 0
  %1714 = vmatpush.bf16.msra.mxu0 0
  %1715 = vmatpush.bf16.msra.mxu0 0
  %1716 = vmatpush.bf16.msra.mxu0 0
  %1717 = vmatpush.bf16.msra.mxu0 0
  %1718 = vmatpush.bf16.msra.mxu0 %v1709
  %1719 = vmatmul.bf16.gmra.mxu0 %v1706
  %v1720 = vpop.f32.mrf.mxu0
  %v1721 = vadd.f32 0.0, %v1720
  %v1722 = vpop.f32.mrf.mxu0
  %v1723 = vadd.f32 0.0, %v1722
  %1724 = vdwg.mxu0
  %v1727 = vunpack.c.l.b16 %v1643
  %v1728 = vunpack.c.l.b16 %v1644
  %v1729 = vpack.c.b16 %v1728, %v1727
  %v1731 = vsel %vm1376, %v1729, 0
  %v1734 = vsel %vm1380, %v1649, 0
  %1736 = vmatpush.bf16.msra.mxu0 0
  %1737 = vmatpush.bf16.msra.mxu0 0
  %1738 = vmatpush.bf16.msra.mxu0 0
  %1739 = vmatpush.bf16.msra.mxu0 0
  %1740 = vmatpush.bf16.msra.mxu0 0
  %1741 = vmatpush.bf16.msra.mxu0 0
  %1742 = vmatpush.bf16.msra.mxu0 0
  %1743 = vmatpush.bf16.msra.mxu0 %v1734
  %1744 = vmatmul.bf16.gmra.mxu0 %v1731
  %v1745 = vpop.f32.mrf.mxu0
  %v1746 = vadd.f32 0.0, %v1745
  %v1747 = vpop.f32.mrf.mxu0
  %v1748 = vadd.f32 0.0, %v1747
  %1749 = vdwg.mxu0
  %v1750 = vadd.f32 %v1671, %v1696
  %v1751 = vadd.f32 %v1750, %v1721
  %v1752 = vadd.f32 %v1751, %v1746
  %v1753 = vadd.f32 %v1673, %v1698
  %v1754 = vadd.f32 %v1753, %v1723
  %v1755 = vadd.f32 %v1754, %v1748
  %v1756 = vadd.f32 %v1479, %v1752
  %v1757 = vadd.f32 %v1480, %v1755
  %v1758 = vpack.c.bf16 %v327, %v327
  %v1759 = vpack.c.bf16 %v328, %v328
  %v1762 = vunpack.c.l.b16 %v1758
  %v1763 = vunpack.c.l.b16 %v1759
  %v1764 = vpack.c.b16 %v1763, %v1762
  %1765 = vrot.lane.b32.xlu0 %v1764, 64
  %v1766 = vpop.permute.xlu0 %1765
  %v1768 = vsel %vm211, %v1766, 0
  %1770 = vmatpush.bf16.msra.mxu0 0
  %1771 = vmatpush.bf16.msra.mxu0 0
  %1772 = vmatpush.bf16.msra.mxu0 0
  %1773 = vmatpush.bf16.msra.mxu0 0
  %1774 = vmatpush.bf16.msra.mxu0 0
  %1775 = vmatpush.bf16.msra.mxu0 0
  %1776 = vmatpush.bf16.msra.mxu0 0
  %1777 = vmatpush.bf16.msra.mxu0 %v1192
  %1778 = vmatmul.bf16.gmra.mxu0 %v1768
  %v1779 = vpop.f32.mrf.mxu0
  %v1780 = vadd.f32 0.0, %v1779
  %v1781 = vpop.f32.mrf.mxu0
  %v1782 = vadd.f32 0.0, %v1781
  %1783 = vdwg.mxu0
  %1784 = vmatpush.bf16.msra.mxu0 0
  %1785 = vmatpush.bf16.msra.mxu0 0
  %1786 = vmatpush.bf16.msra.mxu0 0
  %1787 = vmatpush.bf16.msra.mxu0 0
  %1788 = vmatpush.bf16.msra.mxu0 0
  %1789 = vmatpush.bf16.msra.mxu0 0
  %1790 = vmatpush.bf16.msra.mxu0 0
  %1791 = vmatpush.bf16.msra.mxu0 %v1215
  %1792 = vmatmul.bf16.gmra.mxu0 %v1768
  %v1793 = vpop.f32.mrf.mxu0
  %v1794 = vadd.f32 0.0, %v1793
  %v1795 = vpop.f32.mrf.mxu0
  %v1796 = vadd.f32 0.0, %v1795
  %1797 = vdwg.mxu0
  %1798 = vmatpush.bf16.msra.mxu0 0
  %1799 = vmatpush.bf16.msra.mxu0 0
  %1800 = vmatpush.bf16.msra.mxu0 0
  %1801 = vmatpush.bf16.msra.mxu0 0
  %1802 = vmatpush.bf16.msra.mxu0 0
  %1803 = vmatpush.bf16.msra.mxu0 0
  %1804 = vmatpush.bf16.msra.mxu0 0
  %1805 = vmatpush.bf16.msra.mxu0 %v1235
  %1806 = vmatmul.bf16.gmra.mxu0 %v1768
  %v1807 = vpop.f32.mrf.mxu0
  %v1808 = vadd.f32 0.0, %v1807
  %v1809 = vpop.f32.mrf.mxu0
  %v1810 = vadd.f32 0.0, %v1809
  %1811 = vdwg.mxu0
  %1812 = vmatpush.bf16.msra.mxu0 0
  %1813 = vmatpush.bf16.msra.mxu0 0
  %1814 = vmatpush.bf16.msra.mxu0 0
  %1815 = vmatpush.bf16.msra.mxu0 0
  %1816 = vmatpush.bf16.msra.mxu0 0
  %1817 = vmatpush.bf16.msra.mxu0 0
  %1818 = vmatpush.bf16.msra.mxu0 0
  %1819 = vmatpush.bf16.msra.mxu0 %v1255
  %1820 = vmatmul.bf16.gmra.mxu0 %v1768
  %v1821 = vpop.f32.mrf.mxu0
  %v1822 = vadd.f32 0.0, %v1821
  %v1823 = vpop.f32.mrf.mxu0
  %v1824 = vadd.f32 0.0, %v1823
  %1825 = vdwg.mxu0
  %v1826 = vpack.c.bf16 %v1780, %v1780
  %v1827 = vpack.c.bf16 %v1782, %v1782
  %v1828 = vpack.c.bf16 %v1794, %v1794
  %v1829 = vpack.c.bf16 %v1796, %v1796
  %v1830 = vpack.c.bf16 %v1808, %v1808
  %v1831 = vpack.c.bf16 %v1810, %v1810
  %v1832 = vpack.c.bf16 %v1822, %v1822
  %v1833 = vpack.c.bf16 %v1824, %v1824
  %v1836 = vunpack.c.l.b16 %v1826
  %v1837 = vunpack.c.l.b16 %v1827
  %v1838 = vpack.c.b16 %v1837, %v1836
  %1840 = vmatpush.bf16.msra.mxu0 0
  %1841 = vmatpush.bf16.msra.mxu0 0
  %1842 = vmatpush.bf16.msra.mxu0 0
  %1843 = vmatpush.bf16.msra.mxu0 0
  %1844 = vmatpush.bf16.msra.mxu0 0
  %1845 = vmatpush.bf16.msra.mxu0 0
  %1846 = vmatpush.bf16.msra.mxu0 0
  %1847 = vmatpush.bf16.msra.mxu0 %v1838
  %1848 = vmatmul.bf16.gmra.mxu0 %v952
  %v1849 = vpop.f32.mrf.mxu0
  %v1850 = vadd.f32 0.0, %v1849
  %v1851 = vpop.f32.mrf.mxu0
  %v1852 = vadd.f32 0.0, %v1851
  %1853 = vdwg.mxu0
  %v1856 = vunpack.c.l.b16 %v1828
  %v1857 = vunpack.c.l.b16 %v1829
  %v1858 = vpack.c.b16 %v1857, %v1856
  %1860 = vmatpush.bf16.msra.mxu0 0
  %1861 = vmatpush.bf16.msra.mxu0 0
  %1862 = vmatpush.bf16.msra.mxu0 0
  %1863 = vmatpush.bf16.msra.mxu0 0
  %1864 = vmatpush.bf16.msra.mxu0 0
  %1865 = vmatpush.bf16.msra.mxu0 0
  %1866 = vmatpush.bf16.msra.mxu0 0
  %1867 = vmatpush.bf16.msra.mxu0 %v1858
  %1868 = vmatmul.bf16.gmra.mxu0 %v980
  %v1869 = vpop.f32.mrf.mxu0
  %v1870 = vadd.f32 0.0, %v1869
  %v1871 = vpop.f32.mrf.mxu0
  %v1872 = vadd.f32 0.0, %v1871
  %1873 = vdwg.mxu0
  %v1876 = vunpack.c.l.b16 %v1830
  %v1877 = vunpack.c.l.b16 %v1831
  %v1878 = vpack.c.b16 %v1877, %v1876
  %1880 = vmatpush.bf16.msra.mxu0 0
  %1881 = vmatpush.bf16.msra.mxu0 0
  %1882 = vmatpush.bf16.msra.mxu0 0
  %1883 = vmatpush.bf16.msra.mxu0 0
  %1884 = vmatpush.bf16.msra.mxu0 0
  %1885 = vmatpush.bf16.msra.mxu0 0
  %1886 = vmatpush.bf16.msra.mxu0 0
  %1887 = vmatpush.bf16.msra.mxu0 %v1878
  %1888 = vmatmul.bf16.gmra.mxu0 %v1008
  %v1889 = vpop.f32.mrf.mxu0
  %v1890 = vadd.f32 0.0, %v1889
  %v1891 = vpop.f32.mrf.mxu0
  %v1892 = vadd.f32 0.0, %v1891
  %1893 = vdwg.mxu0
  %v1896 = vunpack.c.l.b16 %v1832
  %v1897 = vunpack.c.l.b16 %v1833
  %v1898 = vpack.c.b16 %v1897, %v1896
  %1900 = vmatpush.bf16.msra.mxu0 0
  %1901 = vmatpush.bf16.msra.mxu0 0
  %1902 = vmatpush.bf16.msra.mxu0 0
  %1903 = vmatpush.bf16.msra.mxu0 0
  %1904 = vmatpush.bf16.msra.mxu0 0
  %1905 = vmatpush.bf16.msra.mxu0 0
  %1906 = vmatpush.bf16.msra.mxu0 0
  %1907 = vmatpush.bf16.msra.mxu0 %v1898
  %1908 = vmatmul.bf16.gmra.mxu0 %v1036
  %v1909 = vpop.f32.mrf.mxu0
  %v1910 = vadd.f32 0.0, %v1909
  %v1911 = vpop.f32.mrf.mxu0
  %v1912 = vadd.f32 0.0, %v1911
  %1913 = vdwg.mxu0
  %v1914 = vpack.c.bf16 %v1850, %v1850
  %v1915 = vpack.c.bf16 %v1852, %v1852
  %v1916 = vpack.c.bf16 %v1870, %v1870
  %v1917 = vpack.c.bf16 %v1872, %v1872
  %v1918 = vpack.c.bf16 %v1890, %v1890
  %v1919 = vpack.c.bf16 %v1892, %v1892
  %v1920 = vpack.c.bf16 %v1910, %v1910
  %v1921 = vpack.c.bf16 %v1912, %v1912
  %s1922 = scalar_lea.vmem %s10, 16
  %v1923 = vld [vmem:[%s1922] sm:$0x3]
  %v1924 = vld [vmem:[%s1922 + $0x2] sm:$0x3]
  %v1925 = vld [vmem:[%s1922 + $0x4] sm:$0x3]
  %v1926 = vld [vmem:[%s1922 + $0x6] sm:$0x3]
  %v1929 = vunpack.c.l.b16 %v1914
  %v1930 = vunpack.c.l.b16 %v1915
  %v1931 = vpack.c.b16 %v1930, %v1929
  %v1933 = vsel %vm1376, %v1931, 0
  %v1936 = vsel %vm1380, %v1923, 0
  %1938 = vmatpush.bf16.msra.mxu0 0
  %1939 = vmatpush.bf16.msra.mxu0 0
  %1940 = vmatpush.bf16.msra.mxu0 0
  %1941 = vmatpush.bf16.msra.mxu0 0
  %1942 = vmatpush.bf16.msra.mxu0 0
  %1943 = vmatpush.bf16.msra.mxu0 0
  %1944 = vmatpush.bf16.msra.mxu0 0
  %1945 = vmatpush.bf16.msra.mxu0 %v1936
  %1946 = vmatmul.bf16.gmra.mxu0 %v1933
  %v1947 = vpop.f32.mrf.mxu0
  %v1948 = vadd.f32 0.0, %v1947
  %v1949 = vpop.f32.mrf.mxu0
  %v1950 = vadd.f32 0.0, %v1949
  %1951 = vdwg.mxu0
  %v1954 = vunpack.c.l.b16 %v1916
  %v1955 = vunpack.c.l.b16 %v1917
  %v1956 = vpack.c.b16 %v1955, %v1954
  %v1958 = vsel %vm1376, %v1956, 0
  %v1961 = vsel %vm1380, %v1924, 0
  %1963 = vmatpush.bf16.msra.mxu0 0
  %1964 = vmatpush.bf16.msra.mxu0 0
  %1965 = vmatpush.bf16.msra.mxu0 0
  %1966 = vmatpush.bf16.msra.mxu0 0
  %1967 = vmatpush.bf16.msra.mxu0 0
  %1968 = vmatpush.bf16.msra.mxu0 0
  %1969 = vmatpush.bf16.msra.mxu0 0
  %1970 = vmatpush.bf16.msra.mxu0 %v1961
  %1971 = vmatmul.bf16.gmra.mxu0 %v1958
  %v1972 = vpop.f32.mrf.mxu0
  %v1973 = vadd.f32 0.0, %v1972
  %v1974 = vpop.f32.mrf.mxu0
  %v1975 = vadd.f32 0.0, %v1974
  %1976 = vdwg.mxu0
  %v1979 = vunpack.c.l.b16 %v1918
  %v1980 = vunpack.c.l.b16 %v1919
  %v1981 = vpack.c.b16 %v1980, %v1979
  %v1983 = vsel %vm1376, %v1981, 0
  %v1986 = vsel %vm1380, %v1925, 0
  %1988 = vmatpush.bf16.msra.mxu0 0
  %1989 = vmatpush.bf16.msra.mxu0 0
  %1990 = vmatpush.bf16.msra.mxu0 0
  %1991 = vmatpush.bf16.msra.mxu0 0
  %1992 = vmatpush.bf16.msra.mxu0 0
  %1993 = vmatpush.bf16.msra.mxu0 0
  %1994 = vmatpush.bf16.msra.mxu0 0
  %1995 = vmatpush.bf16.msra.mxu0 %v1986
  %1996 = vmatmul.bf16.gmra.mxu0 %v1983
  %v1997 = vpop.f32.mrf.mxu0
  %v1998 = vadd.f32 0.0, %v1997
  %v1999 = vpop.f32.mrf.mxu0
  %v2000 = vadd.f32 0.0, %v1999
  %2001 = vdwg.mxu0
  %v2004 = vunpack.c.l.b16 %v1920
  %v2005 = vunpack.c.l.b16 %v1921
  %v2006 = vpack.c.b16 %v2005, %v2004
  %v2008 = vsel %vm1376, %v2006, 0
  %v2011 = vsel %vm1380, %v1926, 0
  %2013 = vmatpush.bf16.msra.mxu0 0
  %2014 = vmatpush.bf16.msra.mxu0 0
  %2015 = vmatpush.bf16.msra.mxu0 0
  %2016 = vmatpush.bf16.msra.mxu0 0
  %2017 = vmatpush.bf16.msra.mxu0 0
  %2018 = vmatpush.bf16.msra.mxu0 0
  %2019 = vmatpush.bf16.msra.mxu0 0
  %2020 = vmatpush.bf16.msra.mxu0 %v2011
  %2021 = vmatmul.bf16.gmra.mxu0 %v2008
  %v2022 = vpop.f32.mrf.mxu0
  %v2023 = vadd.f32 0.0, %v2022
  %v2024 = vpop.f32.mrf.mxu0
  %v2025 = vadd.f32 0.0, %v2024
  %2026 = vdwg.mxu0
  %v2027 = vadd.f32 %v1948, %v1973
  %v2028 = vadd.f32 %v2027, %v1998
  %v2029 = vadd.f32 %v2028, %v2023
  %v2030 = vadd.f32 %v1950, %v1975
  %v2031 = vadd.f32 %v2030, %v2000
  %v2032 = vadd.f32 %v2031, %v2025
  %v2033 = vadd.f32 %v1756, %v2029
  %v2034 = vadd.f32 %v1757, %v2032
  %v2035 = vadd.f32 %v69, %v2033
  %v2036 = vadd.f32 %v70, %v2034
  %v2037 = vld [vmem:[%s11] sm:$0x1]
  %v2038 = vld [vmem:[%s12] sm:$0x1]
  %v2039 = vsel %vm73, %v2035, 0.0
  %2040 = vadd.xlane.f32.xlu0 %v2039
  %v2041 = vpop.xlane.xlu0 %2040
  %v2042 = vsel %vm73, %v2036, 0.0
  %2043 = vadd.xlane.f32.xlu0 %v2042
  %v2044 = vpop.xlane.xlu0 %2043
  %v2045 = vmul.f32 %v2041, %v86
  %v2046 = vmul.f32 %v2044, %v86
  %v2047 = vmul.f32 %v2035, %v2035
  %v2048 = vmul.f32 %v2036, %v2036
  %v2049 = vsel %vm73, %v2047, 0.0
  %2050 = vadd.xlane.f32.xlu0 %v2049
  %v2051 = vpop.xlane.xlu0 %2050
  %v2052 = vsel %vm73, %v2048, 0.0
  %2053 = vadd.xlane.f32.xlu0 %v2052
  %v2054 = vpop.xlane.xlu0 %2053
  %v2055 = vmul.f32 %v2051, %v86
  %v2056 = vmul.f32 %v2054, %v86
  %v2057 = vmul.f32 %v2045, %v2045
  %v2058 = vmul.f32 %v2046, %v2046
  %v2059 = vsub.f32 %v2055, %v2057
  %v2060 = vsub.f32 %v2056, %v2058
  %v2061 = vmax.f32 %v2059, 0.0
  %v2062 = vmax.f32 %v2060, 0.0
  %v2063 = vsub.f32 %v2035, %v2045
  %v2064 = vsub.f32 %v2036, %v2046
  %v2065 = vadd.f32 %v2061, 1e-05
  %v2066 = vadd.f32 %v2062, 1e-05
  %v2067 = vrsqrt.pop %v2065
  %v2068 = vmul.f32 %v2067, %v2065
  %v2069 = vmul.f32 %v2068, %v2067
  %v2070 = vmul.f32 0.5, %v2069
  %v2071 = vsub.f32 1.5, %v2070
  %v2072 = vmul.f32 %v2067, %v2071
  %vm2073 = vweird.f32 %v2065
  %vm2074 = vweird.f32 %v2067
  %vm2075 = vmor %vm2073, %vm2074
  %v2076 = vsel %vm2075, %v2067, %v2072
  %v2077 = vrsqrt.pop %v2066
  %v2078 = vmul.f32 %v2077, %v2066
  %v2079 = vmul.f32 %v2078, %v2077
  %v2080 = vmul.f32 0.5, %v2079
  %v2081 = vsub.f32 1.5, %v2080
  %v2082 = vmul.f32 %v2077, %v2081
  %vm2083 = vweird.f32 %v2066
  %vm2084 = vweird.f32 %v2077
  %vm2085 = vmor %vm2083, %vm2084
  %v2086 = vsel %vm2085, %v2077, %v2082
  %v2087 = vmul.f32 %v2063, %v2076
  %v2088 = vmul.f32 %v2064, %v2086
  %v2090 = vperm.slane %v2037, 0
  %v2092 = vmul.f32 %v2087, %v2090
  %v2093 = vmul.f32 %v2088, %v2090
  %v2095 = vperm.slane %v2038, 0
  %v2097 = vadd.f32 %v2092, %v2095
  %v2098 = vadd.f32 %v2093, %v2095
  %v2099 = vmul.f32 %v2097, %v2097
  %v2100 = vmul.f32 %v2098, %v2098
  %v2101 = vmul.f32 %v2097, %v2099
  %v2102 = vmul.f32 %v2098, %v2100
  %v2103 = vmul.f32 %v2101, 0.044715
  %v2104 = vmul.f32 %v2102, 0.044715
  %v2105 = vadd.f32 %v2097, %v2103
  %v2106 = vadd.f32 %v2098, %v2104
  %v2107 = vmul.f32 %v2105, 0.7978846
  %v2108 = vmul.f32 %v2106, 0.7978846
  %v2109 = vtanh.pop %v2107
  %v2110 = vtanh.pop %v2108
  %v2111 = vadd.f32 %v2109, 1.0
  %v2112 = vadd.f32 %v2110, 1.0
  %v2113 = vmul.f32 %v2111, 0.5
  %v2114 = vmul.f32 %v2112, 0.5
  %v2115 = vmul.f32 %v2097, %v2113
  %v2116 = vmul.f32 %v2098, %v2114
  %v2117 = vld [vmem:[%s13] sm:$0x1]
  %v2118 = vld [vmem:[%s14] sm:$0x1]
  %2121 = vrot.lane.b32.xlu0 %v2047, 112
  %v2122 = vpop.permute.xlu0 %2121
  %2123 = vrot.lane.b32.xlu0 %v2048, 112
  %v2124 = vpop.permute.xlu0 %2123
  %v2127 = vadd.f32 %v2047, %v2122
  %v2128 = vadd.f32 %v2048, %v2124
  %2129 = vrot.lane.b32.xlu0 %v2047, 96
  %v2130 = vpop.permute.xlu0 %2129
  %2131 = vrot.lane.b32.xlu0 %v2048, 96
  %v2132 = vpop.permute.xlu0 %2131
  %v2135 = vadd.f32 %v2127, %v2130
  %v2136 = vadd.f32 %v2128, %v2132
  %v2137 = vadd.f32 %v2135, 1e-08
  %v2138 = vadd.f32 %v2136, 1e-08
  %v2139 = vrsqrt.pop %v2137
  %v2140 = vmul.f32 %v2139, %v2137
  %v2141 = vmul.f32 %v2140, %v2139
  %v2142 = vmul.f32 0.5, %v2141
  %v2143 = vsub.f32 1.5, %v2142
  %v2144 = vmul.f32 %v2139, %v2143
  %vm2145 = vweird.f32 %v2137
  %vm2146 = vweird.f32 %v2139
  %vm2147 = vmor %vm2145, %vm2146
  %v2148 = vsel %vm2147, %v2139, %v2144
  %v2149 = vrsqrt.pop %v2138
  %v2150 = vmul.f32 %v2149, %v2138
  %v2151 = vmul.f32 %v2150, %v2149
  %v2152 = vmul.f32 0.5, %v2151
  %v2153 = vsub.f32 1.5, %v2152
  %v2154 = vmul.f32 %v2149, %v2153
  %vm2155 = vweird.f32 %v2138
  %vm2156 = vweird.f32 %v2149
  %vm2157 = vmor %vm2155, %vm2156
  %v2158 = vsel %vm2157, %v2149, %v2154
  %v2159 = vmul.f32 %v2137, %v2148
  %v2160 = vmul.f32 %v2138, %v2158
  %2163 = vrot.lane.b32.xlu0 %v2159, 96
  %v2164 = vpop.permute.xlu0 %2163
  %2165 = vrot.lane.b32.xlu0 %v2160, 96
  %v2166 = vpop.permute.xlu0 %2165
  %v2169 = vsel %vm211, %v2164, 0.0
  %2170 = vadd.xlane.f32.xlu0 %v2169
  %v2171 = vpop.xlane.xlu0 %2170
  %v2172 = vsel %vm211, %v2166, 0.0
  %2173 = vadd.xlane.f32.xlu0 %v2172
  %v2174 = vpop.xlane.xlu0 %2173
  %v2175 = vmul.f32 %v2171, %v224
  %v2176 = vmul.f32 %v2174, %v224
  %2179 = vrot.lane.b32.xlu0 %v2137, 96
  %v2180 = vpop.permute.xlu0 %2179
  %2181 = vrot.lane.b32.xlu0 %v2138, 96
  %v2182 = vpop.permute.xlu0 %2181
  %v2185 = vsel %vm211, %v2180, 0.0
  %2186 = vadd.xlane.f32.xlu0 %v2185
  %v2187 = vpop.xlane.xlu0 %2186
  %v2188 = vsel %vm211, %v2182, 0.0
  %2189 = vadd.xlane.f32.xlu0 %v2188
  %v2190 = vpop.xlane.xlu0 %2189
  %v2191 = vmul.f32 %v2187, %v224
  %v2192 = vmul.f32 %v2190, %v224
  %v2193 = vmul.f32 %v2175, %v2175
  %v2194 = vmul.f32 %v2176, %v2176
  %v2195 = vsub.f32 %v2191, %v2193
  %v2196 = vsub.f32 %v2192, %v2194
  %v2197 = vmax.f32 %v2195, 0.0
  %v2198 = vmax.f32 %v2196, 0.0
  %v2199 = vsub.f32 %v2159, %v2175
  %v2200 = vsub.f32 %v2160, %v2176
  %v2201 = vadd.f32 %v2197, 1e-05
  %v2202 = vadd.f32 %v2198, 1e-05
  %v2203 = vrsqrt.pop %v2201
  %v2204 = vmul.f32 %v2203, %v2201
  %v2205 = vmul.f32 %v2204, %v2203
  %v2206 = vmul.f32 0.5, %v2205
  %v2207 = vsub.f32 1.5, %v2206
  %v2208 = vmul.f32 %v2203, %v2207
  %vm2209 = vweird.f32 %v2201
  %vm2210 = vweird.f32 %v2203
  %vm2211 = vmor %vm2209, %vm2210
  %v2212 = vsel %vm2211, %v2203, %v2208
  %v2213 = vrsqrt.pop %v2202
  %v2214 = vmul.f32 %v2213, %v2202
  %v2215 = vmul.f32 %v2214, %v2213
  %v2216 = vmul.f32 0.5, %v2215
  %v2217 = vsub.f32 1.5, %v2216
  %v2218 = vmul.f32 %v2213, %v2217
  %vm2219 = vweird.f32 %v2202
  %vm2220 = vweird.f32 %v2213
  %vm2221 = vmor %vm2219, %vm2220
  %v2222 = vsel %vm2221, %v2213, %v2218
  %v2223 = vmul.f32 %v2199, %v2212
  %v2224 = vmul.f32 %v2200, %v2222
  %v2226 = vperm.slane %v2117, 0
  %2227 = vrot.lane.b32.xlu0 %v2226, 32
  %v2228 = vpop.permute.xlu0 %2227
  %v2230 = vmul.f32 %v2223, %v2228
  %v2231 = vmul.f32 %v2224, %v2228
  %v2233 = vperm.slane %v2118, 0
  %2234 = vrot.lane.b32.xlu0 %v2233, 32
  %v2235 = vpop.permute.xlu0 %2234
  %v2237 = vadd.f32 %v2230, %v2235
  %v2238 = vadd.f32 %v2231, %v2235
  %v2239 = vmul.f32 %v2237, %v2237
  %v2240 = vmul.f32 %v2238, %v2238
  %v2241 = vmul.f32 %v2237, %v2239
  %v2242 = vmul.f32 %v2238, %v2240
  %v2243 = vmul.f32 %v2241, 0.044715
  %v2244 = vmul.f32 %v2242, 0.044715
  %v2245 = vadd.f32 %v2237, %v2243
  %v2246 = vadd.f32 %v2238, %v2244
  %v2247 = vmul.f32 %v2245, 0.7978846
  %v2248 = vmul.f32 %v2246, 0.7978846
  %v2249 = vtanh.pop %v2247
  %v2250 = vtanh.pop %v2248
  %v2251 = vadd.f32 %v2249, 1.0
  %v2252 = vadd.f32 %v2250, 1.0
  %v2253 = vmul.f32 %v2251, 0.5
  %v2254 = vmul.f32 %v2252, 0.5
  %v2255 = vmul.f32 %v2237, %v2253
  %v2256 = vmul.f32 %v2238, %v2254
  %v2257 = vmul.f32 %v2255, %v2148
  %v2258 = vmul.f32 %v2256, %v2158
  %v2259 = vmul.f32 %v2035, %v2257
  %v2260 = vmul.f32 %v2036, %v2258
  %2263 = vrot.lane.b32.xlu0 %v2257, 16
  %v2264 = vpop.permute.xlu0 %2263
  %2265 = vrot.lane.b32.xlu0 %v2258, 16
  %v2266 = vpop.permute.xlu0 %2265
  %v2269 = vmul.f32 %v2035, %v2264
  %v2270 = vmul.f32 %v2036, %v2266
  %2271 = vrot.lane.b32.xlu0 %v2257, 32
  %v2272 = vpop.permute.xlu0 %2271
  %2273 = vrot.lane.b32.xlu0 %v2258, 32
  %v2274 = vpop.permute.xlu0 %2273
  %v2277 = vmul.f32 %v2035, %v2272
  %v2278 = vmul.f32 %v2036, %v2274
  %v2279 = vpack.c.bf16 %v2116, %v2115
  %v2280 = vld [vmem:[%s15] sm:$0xf]
  %v2281 = vld [vmem:[%s15 + $0x4] sm:$0xf]
  %v2282 = vld [vmem:[%s15 + $0x8] sm:$0xf]
  %v2283 = vld [vmem:[%s15 + $0xc] sm:$0xf]
  %v2284 = vld [vmem:[%s16] sm:$0x1]
  %v2286 = vperm.slane %v2284, 0
  %v2292 = vunpack.c.l.b16 %v2280
  %v2293 = vunpack.c.l.b16 %v2281
  %v2294 = vunpack.c.l.b16 %v2282
  %v2295 = vunpack.c.l.b16 %v2283
  %v2296 = vpack.c.b16 %v2293, %v2292
  %v2297 = vpack.c.b16 %v2295, %v2294
  %v2301 = vsel %vm73, %v2279, 0
  %2303 = vmatpush.bf16.msra.mxu0 0
  %2304 = vmatpush.bf16.msra.mxu0 0
  %2305 = vmatpush.bf16.msra.mxu0 0
  %2306 = vmatpush.bf16.msra.mxu0 0
  %2307 = vmatpush.bf16.msra.mxu0 0
  %2308 = vmatpush.bf16.msra.mxu0 0
  %2309 = vmatpush.bf16.msra.mxu0 %v2297
  %2310 = vmatpush.bf16.msra.mxu0 %v2296
  %2311 = vmatmul.bf16.gmra.mxu0 %v2301
  %v2312 = vpop.f32.mrf.mxu0
  %v2313 = vadd.f32 %v2286, %v2312
  %v2314 = vpop.f32.mrf.mxu0
  %v2315 = vadd.f32 %v2286, %v2314
  %2316 = vdwg.mxu0
  %v2317 = vmul.f32 %v2313, %v2313
  %v2318 = vmul.f32 %v2315, %v2315
  %v2319 = vmul.f32 %v2313, %v2317
  %v2320 = vmul.f32 %v2315, %v2318
  %v2321 = vmul.f32 %v2319, 0.044715
  %v2322 = vmul.f32 %v2320, 0.044715
  %v2323 = vadd.f32 %v2313, %v2321
  %v2324 = vadd.f32 %v2315, %v2322
  %v2325 = vmul.f32 %v2323, 0.7978846
  %v2326 = vmul.f32 %v2324, 0.7978846
  %v2327 = vtanh.pop %v2325
  %v2328 = vtanh.pop %v2326
  %v2329 = vadd.f32 %v2327, 1.0
  %v2330 = vadd.f32 %v2328, 1.0
  %v2331 = vmul.f32 %v2329, 0.5
  %v2332 = vmul.f32 %v2330, 0.5
  %v2333 = vmul.f32 %v2313, %v2331
  %v2334 = vmul.f32 %v2315, %v2332
  %v2335 = vpack.c.bf16 %v2334, %v2333
  %v2336 = vld [vmem:[%s17] sm:$0xf]
  %v2337 = vld [vmem:[%s17 + $0x4] sm:$0xf]
  %v2338 = vld [vmem:[%s17 + $0x8] sm:$0xf]
  %v2339 = vld [vmem:[%s17 + $0xc] sm:$0xf]
  %v2340 = vld [vmem:[%s17 + $0x10] sm:$0xf]
  %v2341 = vld [vmem:[%s17 + $0x14] sm:$0xf]
  %v2342 = vld [vmem:[%s17 + $0x18] sm:$0xf]
  %v2343 = vld [vmem:[%s17 + $0x1c] sm:$0xf]
  %v2344 = vld [vmem:[%s17 + $0x20] sm:$0xf]
  %v2345 = vld [vmem:[%s17 + $0x24] sm:$0xf]
  %v2346 = vld [vmem:[%s17 + $0x28] sm:$0xf]
  %v2347 = vld [vmem:[%s17 + $0x2c] sm:$0xf]
  %v2348 = vld [vmem:[%s17 + $0x30] sm:$0xf]
  %v2349 = vld [vmem:[%s17 + $0x34] sm:$0xf]
  %v2350 = vld [vmem:[%s17 + $0x38] sm:$0xf]
  %v2351 = vld [vmem:[%s17 + $0x3c] sm:$0xf]
  %v2352 = vld [vmem:[%s18] sm:$0x1]
  %v2354 = vperm.slane %v2352, 0
  %v2372 = vunpack.c.l.b16 %v2336
  %v2373 = vunpack.c.l.b16 %v2337
  %v2374 = vunpack.c.l.b16 %v2338
  %v2375 = vunpack.c.l.b16 %v2339
  %v2376 = vunpack.c.l.b16 %v2340
  %v2377 = vunpack.c.l.b16 %v2341
  %v2378 = vunpack.c.l.b16 %v2342
  %v2379 = vunpack.c.l.b16 %v2343
  %v2380 = vunpack.c.l.b16 %v2344
  %v2381 = vunpack.c.l.b16 %v2345
  %v2382 = vunpack.c.l.b16 %v2346
  %v2383 = vunpack.c.l.b16 %v2347
  %v2384 = vunpack.c.l.b16 %v2348
  %v2385 = vunpack.c.l.b16 %v2349
  %v2386 = vunpack.c.l.b16 %v2350
  %v2387 = vunpack.c.l.b16 %v2351
  %v2388 = vpack.c.b16 %v2373, %v2372
  %v2389 = vpack.c.b16 %v2375, %v2374
  %v2390 = vpack.c.b16 %v2377, %v2376
  %v2391 = vpack.c.b16 %v2379, %v2378
  %v2392 = vpack.c.b16 %v2381, %v2380
  %v2393 = vpack.c.b16 %v2383, %v2382
  %v2394 = vpack.c.b16 %v2385, %v2384
  %v2395 = vpack.c.b16 %v2387, %v2386
  %2404 = vmatpush.bf16.msra.mxu0 %v2395
  %2405 = vmatpush.bf16.msra.mxu0 %v2394
  %2406 = vmatpush.bf16.msra.mxu0 %v2393
  %2407 = vmatpush.bf16.msra.mxu0 %v2392
  %2408 = vmatpush.bf16.msra.mxu0 %v2391
  %2409 = vmatpush.bf16.msra.mxu0 %v2390
  %2410 = vmatpush.bf16.msra.mxu0 %v2389
  %2411 = vmatpush.bf16.msra.mxu0 %v2388
  %2412 = vmatmul.bf16.gmra.mxu0 %v2335
  %v2413 = vpop.f32.mrf.mxu0
  %v2414 = vadd.f32 %v2354, %v2413
  %v2415 = vpop.f32.mrf.mxu0
  %v2416 = vadd.f32 %v2354, %v2415
  %2417 = vdwg.mxu0
  %v2418 = vld [vmem:[%s19] sm:$0xf]
  %v2419 = vld [vmem:[%s19 + $0x4] sm:$0xf]
  %v2420 = vpack.c.bf16 %v2260, %v2259
  %2422 = vrot.lane.b32.xlu0 %v2420, 96
  %v2423 = vpop.permute.xlu0 %2422
  %v2426 = vunpack.c.l.b16 %v2418
  %v2427 = vunpack.c.l.b16 %v2419
  %v2428 = vpack.c.b16 %v2427, %v2426
  %v2431 = vsel %vm211, %v2423, 0
  %2433 = vmatpush.bf16.msra.mxu0 0
  %2434 = vmatpush.bf16.msra.mxu0 0
  %2435 = vmatpush.bf16.msra.mxu0 0
  %2436 = vmatpush.bf16.msra.mxu0 0
  %2437 = vmatpush.bf16.msra.mxu0 0
  %2438 = vmatpush.bf16.msra.mxu0 0
  %2439 = vmatpush.bf16.msra.mxu0 0
  %2440 = vmatpush.bf16.msra.mxu0 %v2428
  %2441 = vmatmul.bf16.gmra.mxu0 %v2431
  %v2442 = vpop.f32.mrf.mxu0
  %v2443 = vadd.f32 0.0, %v2442
  %v2444 = vpop.f32.mrf.mxu0
  %v2445 = vadd.f32 0.0, %v2444
  %2446 = vdwg.mxu0
  %v2447 = vpack.c.bf16 %v2445, %v2443
  %v2448 = vld [vmem:[%s20] sm:$0xf]
  %v2449 = vld [vmem:[%s20 + $0x4] sm:$0xf]
  %v2450 = vld [vmem:[%s20 + $0x8] sm:$0xf]
  %v2451 = vld [vmem:[%s20 + $0xc] sm:$0xf]
  %v2456 = vunpack.c.l.b16 %v2448
  %v2457 = vunpack.c.l.b16 %v2449
  %v2458 = vunpack.c.l.b16 %v2450
  %v2459 = vunpack.c.l.b16 %v2451
  %v2460 = vpack.c.b16 %v2457, %v2456
  %v2461 = vpack.c.b16 %v2459, %v2458
  %v2465 = vsel %vm73, %v2447, 0
  %2467 = vmatpush.bf16.msra.mxu0 0
  %2468 = vmatpush.bf16.msra.mxu0 0
  %2469 = vmatpush.bf16.msra.mxu0 0
  %2470 = vmatpush.bf16.msra.mxu0 0
  %2471 = vmatpush.bf16.msra.mxu0 0
  %2472 = vmatpush.bf16.msra.mxu0 0
  %2473 = vmatpush.bf16.msra.mxu0 %v2461
  %2474 = vmatpush.bf16.msra.mxu0 %v2460
  %2475 = vmatmul.bf16.gmra.mxu0 %v2465
  %v2476 = vpop.f32.mrf.mxu0
  %v2477 = vadd.f32 0.0, %v2476
  %v2478 = vpop.f32.mrf.mxu0
  %v2479 = vadd.f32 0.0, %v2478
  %2480 = vdwg.mxu0
  %v2481 = vadd.f32 %v2414, %v2477
  %v2482 = vadd.f32 %v2416, %v2479
  %v2483 = vpack.c.bf16 %v2270, %v2269
  %2485 = vrot.lane.b32.xlu0 %v2483, 80
  %v2486 = vpop.permute.xlu0 %2485
  %v2488 = vsel %vm211, %v2486, 0
  %2490 = vmatpush.bf16.msra.mxu0 0
  %2491 = vmatpush.bf16.msra.mxu0 0
  %2492 = vmatpush.bf16.msra.mxu0 0
  %2493 = vmatpush.bf16.msra.mxu0 0
  %2494 = vmatpush.bf16.msra.mxu0 0
  %2495 = vmatpush.bf16.msra.mxu0 0
  %2496 = vmatpush.bf16.msra.mxu0 0
  %2497 = vmatpush.bf16.msra.mxu0 %v2428
  %2498 = vmatmul.bf16.gmra.mxu0 %v2488
  %v2499 = vpop.f32.mrf.mxu0
  %v2500 = vadd.f32 0.0, %v2499
  %v2501 = vpop.f32.mrf.mxu0
  %v2502 = vadd.f32 0.0, %v2501
  %2503 = vdwg.mxu0
  %v2504 = vpack.c.bf16 %v2502, %v2500
  %s2505 = scalar_lea.vmem %s20, 16
  %v2506 = vld [vmem:[%s2505] sm:$0xf]
  %v2507 = vld [vmem:[%s2505 + $0x4] sm:$0xf]
  %v2508 = vld [vmem:[%s2505 + $0x8] sm:$0xf]
  %v2509 = vld [vmem:[%s2505 + $0xc] sm:$0xf]
  %v2514 = vunpack.c.l.b16 %v2506
  %v2515 = vunpack.c.l.b16 %v2507
  %v2516 = vunpack.c.l.b16 %v2508
  %v2517 = vunpack.c.l.b16 %v2509
  %v2518 = vpack.c.b16 %v2515, %v2514
  %v2519 = vpack.c.b16 %v2517, %v2516
  %v2523 = vsel %vm73, %v2504, 0
  %2525 = vmatpush.bf16.msra.mxu0 0
  %2526 = vmatpush.bf16.msra.mxu0 0
  %2527 = vmatpush.bf16.msra.mxu0 0
  %2528 = vmatpush.bf16.msra.mxu0 0
  %2529 = vmatpush.bf16.msra.mxu0 0
  %2530 = vmatpush.bf16.msra.mxu0 0
  %2531 = vmatpush.bf16.msra.mxu0 %v2519
  %2532 = vmatpush.bf16.msra.mxu0 %v2518
  %2533 = vmatmul.bf16.gmra.mxu0 %v2523
  %v2534 = vpop.f32.mrf.mxu0
  %v2535 = vadd.f32 0.0, %v2534
  %v2536 = vpop.f32.mrf.mxu0
  %v2537 = vadd.f32 0.0, %v2536
  %2538 = vdwg.mxu0
  %v2539 = vadd.f32 %v2481, %v2535
  %v2540 = vadd.f32 %v2482, %v2537
  %v2541 = vpack.c.bf16 %v2278, %v2277
  %2543 = vrot.lane.b32.xlu0 %v2541, 64
  %v2544 = vpop.permute.xlu0 %2543
  %v2546 = vsel %vm211, %v2544, 0
  %2548 = vmatpush.bf16.msra.mxu0 0
  %2549 = vmatpush.bf16.msra.mxu0 0
  %2550 = vmatpush.bf16.msra.mxu0 0
  %2551 = vmatpush.bf16.msra.mxu0 0
  %2552 = vmatpush.bf16.msra.mxu0 0
  %2553 = vmatpush.bf16.msra.mxu0 0
  %2554 = vmatpush.bf16.msra.mxu0 0
  %2555 = vmatpush.bf16.msra.mxu0 %v2428
  %2556 = vmatmul.bf16.gmra.mxu0 %v2546
  %v2557 = vpop.f32.mrf.mxu0
  %v2558 = vadd.f32 0.0, %v2557
  %v2559 = vpop.f32.mrf.mxu0
  %v2560 = vadd.f32 0.0, %v2559
  %2561 = vdwg.mxu0
  %v2562 = vpack.c.bf16 %v2560, %v2558
  %s2563 = scalar_lea.vmem %s20, 32
  %v2564 = vld [vmem:[%s2563] sm:$0xf]
  %v2565 = vld [vmem:[%s2563 + $0x4] sm:$0xf]
  %v2566 = vld [vmem:[%s2563 + $0x8] sm:$0xf]
  %v2567 = vld [vmem:[%s2563 + $0xc] sm:$0xf]
  %v2572 = vunpack.c.l.b16 %v2564
  %v2573 = vunpack.c.l.b16 %v2565
  %v2574 = vunpack.c.l.b16 %v2566
  %v2575 = vunpack.c.l.b16 %v2567
  %v2576 = vpack.c.b16 %v2573, %v2572
  %v2577 = vpack.c.b16 %v2575, %v2574
  %v2581 = vsel %vm73, %v2562, 0
  %2583 = vmatpush.bf16.msra.mxu0 0
  %2584 = vmatpush.bf16.msra.mxu0 0
  %2585 = vmatpush.bf16.msra.mxu0 0
  %2586 = vmatpush.bf16.msra.mxu0 0
  %2587 = vmatpush.bf16.msra.mxu0 0
  %2588 = vmatpush.bf16.msra.mxu0 0
  %2589 = vmatpush.bf16.msra.mxu0 %v2577
  %2590 = vmatpush.bf16.msra.mxu0 %v2576
  %2591 = vmatmul.bf16.gmra.mxu0 %v2581
  %v2592 = vpop.f32.mrf.mxu0
  %v2593 = vadd.f32 0.0, %v2592
  %v2594 = vpop.f32.mrf.mxu0
  %v2595 = vadd.f32 0.0, %v2594
  %2596 = vdwg.mxu0
  %v2597 = vadd.f32 %v2539, %v2593
  %v2598 = vadd.f32 %v2540, %v2595
  %v2599 = vadd.f32 %v2035, %v2597
  %v2600 = vadd.f32 %v2036, %v2598
  %2601 = vst [vmem:[%s21] sm:$0xff] %v2599
  %2602 = vst [vmem:[%s21 + $0x8] sm:$0xff] %v2600
  // Predicated region
  $region86: #{attention_layer_forward.1} parent=0 // pred_check
    _
  $region87: #{attention_layer_forward.1} parent=0 // pred_check_branch
    %2604 = sbr.rel (0) target = $region89
  $region88: #{attention_layer_forward.1} parent=0 // pred_region
    _
  $region89: #{attention_layer_forward.1} parent=0 // pred_fallthru
    _
  // Predicated region
  $region90: #{attention_layer_forward.1} parent=0 // pred_check
    _
  $region91: #{attention_layer_forward.1} parent=0 // pred_check_branch
    %2606 = sbr.rel (0) target = $region93
  $region92: #{attention_layer_forward.1} parent=0 // pred_region
    _
  $region93: #{attention_layer_forward.1} parent=0 // pred_fallthru
    _

</llo_original>
